<compile_context>
chip_gen: v7x
topology: tpu7x:2x2x1
jax: 0.10.0
libtpu: 0.0.40
codegen_flags: <defaults>
</compile_context>

<pallas_src>
import functools

import jax
import jax.numpy as jnp
from jax.experimental import pallas as pl
from jax.experimental.pallas import tpu as pltpu


def _dqn_net_kernel(x_ref, w1_ref, b1_ref, wh_ref, bh_ref, wo_ref, bo_ref,
                    out_ref, *, n_objectives, num_hidden, n_actions,
                    pad_lanes):
    # x_ref:  (B, n_obs)            f32, shared by both nets
    # w1_ref: (1, J, n_obs, H)      bf16, this net's first layers
    # b1_ref: (1, J, 1, H)          f32
    # wh_ref: (1, J, L, H, H)       bf16
    # bh_ref: (1, J, L, 1, H)       f32
    # wo_ref: (1, J, H, A)          bf16
    # bo_ref: (1, J, 1, A)          f32
    # out_ref:(1, B, P)             P = pad128(J * A), lane-dense slab
    x = x_ref[...]  # already f32, no cast

    head_outs = []
    for j in range(n_objectives):          # static unroll (small, fixed)
        h = jnp.dot(x, w1_ref[0, j].astype(jnp.float32),
                    preferred_element_type=jnp.float32) + b1_ref[0, j]
        h = jnp.maximum(h, 0.0)
        for l in range(num_hidden):
            h = jnp.dot(h, wh_ref[0, j, l].astype(jnp.float32),
                        preferred_element_type=jnp.float32) + bh_ref[0, j, l]
            h = jnp.maximum(h, 0.0)
        o = jnp.dot(h, wo_ref[0, j].astype(jnp.float32),
                    preferred_element_type=jnp.float32) + bo_ref[0, j]
        head_outs.append(o)                # (B, A) f32

    b = x.shape[0]
    if pad_lanes:
        head_outs.append(jnp.zeros((b, pad_lanes), jnp.float32))
    # One unmasked, 128-lane-aligned store per net.
    out_ref[0] = jnp.concatenate(head_outs, axis=-1)


def multi_dqn_forward(x, params):
    """x: (B, n_obs) f32.  params: per-net stacked weights (see make_params).

    Returns (2, B, n_objectives, n_actions), matching
    Multi_DQN_Network.forward (nets stacked at dim 0, objectives at dim 2 of
    the result, i.e. dim 1 of each net's output).
    """
    w1, b1 = params["w1"], params["b1"]   # (2, J, n_obs, H), (2, J, 1, H)
    wh, bh = params["wh"], params["bh"]   # (2, J, L, H, H),  (2, J, L, 1, H)
    wo, bo = params["wo"], params["bo"]   # (2, J, H, A),     (2, J, 1, A)

    n_nets, J, n_obs, H = w1.shape
    L = wh.shape[2]
    A = wo.shape[-1]
    B = x.shape[0]

    valid_lanes = J * A
    P = ((valid_lanes + 127) // 128) * 128       # 128-aligned output slab
    pad_lanes = P - valid_lanes

    kernel = functools.partial(
        _dqn_net_kernel, n_objectives=J, num_hidden=L, n_actions=A,
        pad_lanes=pad_lanes)

    flops = 2 * n_nets * J * B * (n_obs * H + L * H * H + H * A)
    bytes_accessed = (x.size * x.dtype.itemsize
                      + sum(p.size * p.dtype.itemsize for p in params.values())
                      + n_nets * B * P * 4)

    out = pl.pallas_call(
        kernel,
        out_shape=jax.ShapeDtypeStruct((n_nets, B, P), jnp.float32),
        grid_spec=pltpu.PrefetchScalarGridSpec(
            num_scalar_prefetch=0,
            grid=(n_nets,),                       # one step per net (2 TCs on v7x)
            in_specs=[
                pl.BlockSpec((B, n_obs), lambda n: (0, 0)),                # x (shared)
                pl.BlockSpec((1, J, n_obs, H), lambda n: (n, 0, 0, 0)),    # w1
                pl.BlockSpec((1, J, 1, H), lambda n: (n, 0, 0, 0)),        # b1
                pl.BlockSpec((1, J, L, H, H), lambda n: (n, 0, 0, 0, 0)),  # wh
                pl.BlockSpec((1, J, L, 1, H), lambda n: (n, 0, 0, 0, 0)),  # bh
                pl.BlockSpec((1, J, H, A), lambda n: (n, 0, 0, 0)),        # wo
                pl.BlockSpec((1, J, 1, A), lambda n: (n, 0, 0, 0)),        # bo
            ],
            out_specs=pl.BlockSpec((1, B, P), lambda n: (n, 0, 0)),
        ),
        compiler_params=pltpu.CompilerParams(
            dimension_semantics=("parallel",)),
        cost_estimate=pl.CostEstimate(
            flops=flops, transcendentals=0, bytes_accessed=bytes_accessed),
    )(x, w1, b1, wh, bh, wo, bo)

    out = out[:, :, :valid_lanes]                 # drop lane padding
    return out.reshape(n_nets, B, J, A)


def make_params(key, n_obs, n_actions, n_objectives, hidden_sizes,
                weight_dtype=jnp.bfloat16):
    """Deterministic synthetic Linear params, stacked as (net=2, objective, ...).

    Weights are stored transposed as (in, out) so the kernel computes
    y = x @ W + b (equivalent to torch's x @ W.T + b).  Weights are bf16
    (halves DMA volume); biases stay f32.
    """
    H = hidden_sizes[0]
    assert all(h == H for h in hidden_sizes), "kernel assumes uniform hidden size"
    L = len(hidden_sizes) - 1                 # number of hidden (H->H) layers
    N, J = 2, n_objectives                    # ego + social nets

    keys = jax.random.split(key, 6)

    def init(k, shape, fan_in, dtype):
        bound = 1.0 / (fan_in ** 0.5)
        return jax.random.uniform(k, shape, jnp.float32, -bound, bound).astype(dtype)

    return {
        "w1": init(keys[0], (N, J, n_obs, H), n_obs, weight_dtype),
        "b1": init(keys[1], (N, J, 1, H), n_obs, jnp.float32),
        "wh": init(keys[2], (N, J, L, H, H), H, weight_dtype),
        "bh": init(keys[3], (N, J, L, 1, H), H, jnp.float32),
        "wo": init(keys[4], (N, J, H, n_actions), H, weight_dtype),
        "bo": init(keys[5], (N, J, 1, n_actions), H, jnp.float32),
    }


def reference_forward(x, params):
    """Pure-JAX reference matching the PyTorch forward semantics, computed in
    f32 on the same bf16-quantised weights the kernel sees."""
    w1 = params["w1"].astype(jnp.float32); b1 = params["b1"]
    wh = params["wh"].astype(jnp.float32); bh = params["bh"]
    wo = params["wo"].astype(jnp.float32); bo = params["bo"]
    N, J = w1.shape[:2]
    L = wh.shape[2]
    nets = []
    for n in range(N):
        objs = []
        for j in range(J):
            h = jnp.maximum(x @ w1[n, j] + b1[n, j], 0.0)
            for l in range(L):
                h = jnp.maximum(h @ wh[n, j, l] + bh[n, j, l], 0.0)
            objs.append(h @ wo[n, j] + bo[n, j])     # (B, A)
        nets.append(jnp.stack(objs, axis=1))         # (B, J, A)
    return jnp.stack(nets, axis=0)                   # (2, B, J, A)


if __name__ == "__main__":
    # Small shapes consistent with the module's forward.
    B = 8                 # batch
    n_obs = 16            # n_observations
    n_actions = 8
    n_objectives = 3
    hidden_sizes = [128, 128, 128]    # Multi_DQN_Network default

    key = jax.random.PRNGKey(0)
    kx, kp = jax.random.split(key)
    x = jax.random.normal(kx, (B, n_obs), jnp.float32)
    params = make_params(kp, n_obs, n_actions, n_objectives, hidden_sizes)

    out = jax.jit(multi_dqn_forward)(x, params)
    out = jax.block_until_ready(out)

    ref = reference_forward(x, params)
    assert out.shape == (2, B, n_objectives, n_actions), out.shape
    assert jnp.allclose(out, ref, atol=1e-3, rtol=1e-3), \
        float(jnp.max(jnp.abs(out - ref)))

    print("KERNEL_OK")
</pallas_src>

<mosaic_0001>
module attributes {stable_mosaic.version = 11 : i64} {
  func.func @_dqn_net_kernel(%arg0: i32, %arg1: memref<8x16xf32, #tpu.memory_space<vmem>>, %arg2: memref<1x3x16x128xbf16, #tpu.memory_space<vmem>>, %arg3: memref<1x3x1x128xf32, #tpu.memory_space<vmem>>, %arg4: memref<1x3x2x128x128xbf16, #tpu.memory_space<vmem>>, %arg5: memref<1x3x2x1x128xf32, #tpu.memory_space<vmem>>, %arg6: memref<1x3x128x8xbf16, #tpu.memory_space<vmem>>, %arg7: memref<1x3x1x8xf32, #tpu.memory_space<vmem>>, %arg8: memref<1x8x128xf32, #tpu.memory_space<vmem>>) attributes {dimension_semantics = [#tpu.dimension_semantics<parallel>], iteration_bounds = array<i64: 2>, scalar_prefetch = 0 : i64, scratch_operands = 0 : i64, tpu.core_type = #tpu.core_type<tc>, window_params = [{pipeline_mode = #tpu.pipeline_mode<synchronous>, transform_indices = @transform_0, window_bounds = array<i64: 8, 16>}, {transform_indices = @transform_1, window_bounds = array<i64: 1, 3, 16, 128>}, {transform_indices = @transform_2, window_bounds = array<i64: 1, 3, 1, 128>}, {transform_indices = @transform_3, window_bounds = array<i64: 1, 3, 2, 128, 128>}, {transform_indices = @transform_4, window_bounds = array<i64: 1, 3, 2, 1, 128>}, {transform_indices = @transform_5, window_bounds = array<i64: 1, 3, 128, 8>}, {transform_indices = @transform_6, window_bounds = array<i64: 1, 3, 1, 8>}, {transform_indices = @transform_7, window_bounds = array<i64: 1, 8, 128>}]} {
    %c0 = arith.constant 0 : index
    %c0_0 = arith.constant 0 : index
    %0 = vector.load %arg1[%c0, %c0_0] : memref<8x16xf32, #tpu.memory_space<vmem>>, vector<8x16xf32>
    %c0_1 = arith.constant 0 : index
    %c0_2 = arith.constant 0 : index
    %c0_3 = arith.constant 0 : index
    %c0_4 = arith.constant 0 : index
    %1 = vector.load %arg2[%c0_1, %c0_2, %c0_3, %c0_4] : memref<1x3x16x128xbf16, #tpu.memory_space<vmem>>, vector<1x1x16x128xbf16>
    %2 = vector.shape_cast %1 : vector<1x1x16x128xbf16> to vector<16x128xbf16>
    %3 = arith.extf %2 : vector<16x128xbf16> to vector<16x128xf32>
    %cst = arith.constant dense<0.000000e+00> : vector<8x128xf32>
    %4 = tpu.matmul %0, %3, %cst {dimension_numbers = #tpu.dot_dimension_numbers<[1], [0], [0], [1], [0, 0, 1, 1], [], []>} : vector<8x16xf32>, vector<16x128xf32>, vector<8x128xf32> -> vector<8x128xf32>
    %c0_5 = arith.constant 0 : index
    %c0_6 = arith.constant 0 : index
    %c0_7 = arith.constant 0 : index
    %c0_8 = arith.constant 0 : index
    %5 = vector.load %arg3[%c0_5, %c0_6, %c0_7, %c0_8] : memref<1x3x1x128xf32, #tpu.memory_space<vmem>>, vector<1x1x1x128xf32>
    %6 = vector.shape_cast %5 : vector<1x1x1x128xf32> to vector<1x128xf32>
    %7 = vector.broadcast %6 : vector<1x128xf32> to vector<8x128xf32>
    %8 = arith.addf %4, %7 : vector<8x128xf32>
    %cst_9 = arith.constant 0.000000e+00 : f32
    %9 = vector.broadcast %cst_9 : f32 to vector<8x128xf32>
    %10 = arith.maximumf %8, %9 : vector<8x128xf32>
    %c0_10 = arith.constant 0 : index
    %c0_11 = arith.constant 0 : index
    %c0_12 = arith.constant 0 : index
    %c0_13 = arith.constant 0 : index
    %c0_14 = arith.constant 0 : index
    %11 = vector.load %arg4[%c0_10, %c0_11, %c0_12, %c0_13, %c0_14] : memref<1x3x2x128x128xbf16, #tpu.memory_space<vmem>>, vector<1x1x1x128x128xbf16>
    %12 = vector.shape_cast %11 : vector<1x1x1x128x128xbf16> to vector<128x128xbf16>
    %13 = arith.extf %12 : vector<128x128xbf16> to vector<128x128xf32>
    %cst_15 = arith.constant dense<0.000000e+00> : vector<8x128xf32>
    %14 = tpu.matmul %10, %13, %cst_15 {dimension_numbers = #tpu.dot_dimension_numbers<[1], [0], [0], [1], [0, 0, 1, 1], [], []>} : vector<8x128xf32>, vector<128x128xf32>, vector<8x128xf32> -> vector<8x128xf32>
    %c0_16 = arith.constant 0 : index
    %c0_17 = arith.constant 0 : index
    %c0_18 = arith.constant 0 : index
    %c0_19 = arith.constant 0 : index
    %c0_20 = arith.constant 0 : index
    %15 = vector.load %arg5[%c0_16, %c0_17, %c0_18, %c0_19, %c0_20] : memref<1x3x2x1x128xf32, #tpu.memory_space<vmem>>, vector<1x1x1x1x128xf32>
    %16 = vector.shape_cast %15 : vector<1x1x1x1x128xf32> to vector<1x128xf32>
    %17 = vector.broadcast %16 : vector<1x128xf32> to vector<8x128xf32>
    %18 = arith.addf %14, %17 : vector<8x128xf32>
    %cst_21 = arith.constant 0.000000e+00 : f32
    %19 = vector.broadcast %cst_21 : f32 to vector<8x128xf32>
    %20 = arith.maximumf %18, %19 : vector<8x128xf32>
    %c0_22 = arith.constant 0 : index
    %c0_23 = arith.constant 0 : index
    %c1 = arith.constant 1 : index
    %c0_24 = arith.constant 0 : index
    %c0_25 = arith.constant 0 : index
    %21 = vector.load %arg4[%c0_22, %c0_23, %c1, %c0_24, %c0_25] : memref<1x3x2x128x128xbf16, #tpu.memory_space<vmem>>, vector<1x1x1x128x128xbf16>
    %22 = vector.shape_cast %21 : vector<1x1x1x128x128xbf16> to vector<128x128xbf16>
    %23 = arith.extf %22 : vector<128x128xbf16> to vector<128x128xf32>
    %cst_26 = arith.constant dense<0.000000e+00> : vector<8x128xf32>
    %24 = tpu.matmul %20, %23, %cst_26 {dimension_numbers = #tpu.dot_dimension_numbers<[1], [0], [0], [1], [0, 0, 1, 1], [], []>} : vector<8x128xf32>, vector<128x128xf32>, vector<8x128xf32> -> vector<8x128xf32>
    %c0_27 = arith.constant 0 : index
    %c0_28 = arith.constant 0 : index
    %c1_29 = arith.constant 1 : index
    %c0_30 = arith.constant 0 : index
    %c0_31 = arith.constant 0 : index
    %25 = vector.load %arg5[%c0_27, %c0_28, %c1_29, %c0_30, %c0_31] : memref<1x3x2x1x128xf32, #tpu.memory_space<vmem>>, vector<1x1x1x1x128xf32>
    %26 = vector.shape_cast %25 : vector<1x1x1x1x128xf32> to vector<1x128xf32>
    %27 = vector.broadcast %26 : vector<1x128xf32> to vector<8x128xf32>
    %28 = arith.addf %24, %27 : vector<8x128xf32>
    %cst_32 = arith.constant 0.000000e+00 : f32
    %29 = vector.broadcast %cst_32 : f32 to vector<8x128xf32>
    %30 = arith.maximumf %28, %29 : vector<8x128xf32>
    %c0_33 = arith.constant 0 : index
    %c0_34 = arith.constant 0 : index
    %c0_35 = arith.constant 0 : index
    %c0_36 = arith.constant 0 : index
    %31 = vector.load %arg6[%c0_33, %c0_34, %c0_35, %c0_36] : memref<1x3x128x8xbf16, #tpu.memory_space<vmem>>, vector<1x1x128x8xbf16>
    %32 = vector.shape_cast %31 : vector<1x1x128x8xbf16> to vector<128x8xbf16>
    %33 = arith.extf %32 : vector<128x8xbf16> to vector<128x8xf32>
    %cst_37 = arith.constant dense<0.000000e+00> : vector<8x8xf32>
    %34 = tpu.matmul %30, %33, %cst_37 {dimension_numbers = #tpu.dot_dimension_numbers<[1], [0], [0], [1], [0, 0, 1, 1], [], []>} : vector<8x128xf32>, vector<128x8xf32>, vector<8x8xf32> -> vector<8x8xf32>
    %c0_38 = arith.constant 0 : index
    %c0_39 = arith.constant 0 : index
    %c0_40 = arith.constant 0 : index
    %c0_41 = arith.constant 0 : index
    %35 = vector.load %arg7[%c0_38, %c0_39, %c0_40, %c0_41] : memref<1x3x1x8xf32, #tpu.memory_space<vmem>>, vector<1x1x1x8xf32>
    %36 = vector.shape_cast %35 : vector<1x1x1x8xf32> to vector<1x8xf32>
    %37 = vector.broadcast %36 : vector<1x8xf32> to vector<8x8xf32>
    %38 = arith.addf %34, %37 : vector<8x8xf32>
    %c0_42 = arith.constant 0 : index
    %c1_43 = arith.constant 1 : index
    %c0_44 = arith.constant 0 : index
    %c0_45 = arith.constant 0 : index
    %39 = vector.load %arg2[%c0_42, %c1_43, %c0_44, %c0_45] : memref<1x3x16x128xbf16, #tpu.memory_space<vmem>>, vector<1x1x16x128xbf16>
    %40 = vector.shape_cast %39 : vector<1x1x16x128xbf16> to vector<16x128xbf16>
    %41 = arith.extf %40 : vector<16x128xbf16> to vector<16x128xf32>
    %cst_46 = arith.constant dense<0.000000e+00> : vector<8x128xf32>
    %42 = tpu.matmul %0, %41, %cst_46 {dimension_numbers = #tpu.dot_dimension_numbers<[1], [0], [0], [1], [0, 0, 1, 1], [], []>} : vector<8x16xf32>, vector<16x128xf32>, vector<8x128xf32> -> vector<8x128xf32>
    %c0_47 = arith.constant 0 : index
    %c1_48 = arith.constant 1 : index
    %c0_49 = arith.constant 0 : index
    %c0_50 = arith.constant 0 : index
    %43 = vector.load %arg3[%c0_47, %c1_48, %c0_49, %c0_50] : memref<1x3x1x128xf32, #tpu.memory_space<vmem>>, vector<1x1x1x128xf32>
    %44 = vector.shape_cast %43 : vector<1x1x1x128xf32> to vector<1x128xf32>
    %45 = vector.broadcast %44 : vector<1x128xf32> to vector<8x128xf32>
    %46 = arith.addf %42, %45 : vector<8x128xf32>
    %cst_51 = arith.constant 0.000000e+00 : f32
    %47 = vector.broadcast %cst_51 : f32 to vector<8x128xf32>
    %48 = arith.maximumf %46, %47 : vector<8x128xf32>
    %c0_52 = arith.constant 0 : index
    %c1_53 = arith.constant 1 : index
    %c0_54 = arith.constant 0 : index
    %c0_55 = arith.constant 0 : index
    %c0_56 = arith.constant 0 : index
    %49 = vector.load %arg4[%c0_52, %c1_53, %c0_54, %c0_55, %c0_56] : memref<1x3x2x128x128xbf16, #tpu.memory_space<vmem>>, vector<1x1x1x128x128xbf16>
    %50 = vector.shape_cast %49 : vector<1x1x1x128x128xbf16> to vector<128x128xbf16>
    %51 = arith.extf %50 : vector<128x128xbf16> to vector<128x128xf32>
    %cst_57 = arith.constant dense<0.000000e+00> : vector<8x128xf32>
    %52 = tpu.matmul %48, %51, %cst_57 {dimension_numbers = #tpu.dot_dimension_numbers<[1], [0], [0], [1], [0, 0, 1, 1], [], []>} : vector<8x128xf32>, vector<128x128xf32>, vector<8x128xf32> -> vector<8x128xf32>
    %c0_58 = arith.constant 0 : index
    %c1_59 = arith.constant 1 : index
    %c0_60 = arith.constant 0 : index
    %c0_61 = arith.constant 0 : index
    %c0_62 = arith.constant 0 : index
    %53 = vector.load %arg5[%c0_58, %c1_59, %c0_60, %c0_61, %c0_62] : memref<1x3x2x1x128xf32, #tpu.memory_space<vmem>>, vector<1x1x1x1x128xf32>
    %54 = vector.shape_cast %53 : vector<1x1x1x1x128xf32> to vector<1x128xf32>
    %55 = vector.broadcast %54 : vector<1x128xf32> to vector<8x128xf32>
    %56 = arith.addf %52, %55 : vector<8x128xf32>
    %cst_63 = arith.constant 0.000000e+00 : f32
    %57 = vector.broadcast %cst_63 : f32 to vector<8x128xf32>
    %58 = arith.maximumf %56, %57 : vector<8x128xf32>
    %c0_64 = arith.constant 0 : index
    %c1_65 = arith.constant 1 : index
    %c1_66 = arith.constant 1 : index
    %c0_67 = arith.constant 0 : index
    %c0_68 = arith.constant 0 : index
    %59 = vector.load %arg4[%c0_64, %c1_65, %c1_66, %c0_67, %c0_68] : memref<1x3x2x128x128xbf16, #tpu.memory_space<vmem>>, vector<1x1x1x128x128xbf16>
    %60 = vector.shape_cast %59 : vector<1x1x1x128x128xbf16> to vector<128x128xbf16>
    %61 = arith.extf %60 : vector<128x128xbf16> to vector<128x128xf32>
    %cst_69 = arith.constant dense<0.000000e+00> : vector<8x128xf32>
    %62 = tpu.matmul %58, %61, %cst_69 {dimension_numbers = #tpu.dot_dimension_numbers<[1], [0], [0], [1], [0, 0, 1, 1], [], []>} : vector<8x128xf32>, vector<128x128xf32>, vector<8x128xf32> -> vector<8x128xf32>
    %c0_70 = arith.constant 0 : index
    %c1_71 = arith.constant 1 : index
    %c1_72 = arith.constant 1 : index
    %c0_73 = arith.constant 0 : index
    %c0_74 = arith.constant 0 : index
    %63 = vector.load %arg5[%c0_70, %c1_71, %c1_72, %c0_73, %c0_74] : memref<1x3x2x1x128xf32, #tpu.memory_space<vmem>>, vector<1x1x1x1x128xf32>
    %64 = vector.shape_cast %63 : vector<1x1x1x1x128xf32> to vector<1x128xf32>
    %65 = vector.broadcast %64 : vector<1x128xf32> to vector<8x128xf32>
    %66 = arith.addf %62, %65 : vector<8x128xf32>
    %cst_75 = arith.constant 0.000000e+00 : f32
    %67 = vector.broadcast %cst_75 : f32 to vector<8x128xf32>
    %68 = arith.maximumf %66, %67 : vector<8x128xf32>
    %c0_76 = arith.constant 0 : index
    %c1_77 = arith.constant 1 : index
    %c0_78 = arith.constant 0 : index
    %c0_79 = arith.constant 0 : index
    %69 = vector.load %arg6[%c0_76, %c1_77, %c0_78, %c0_79] : memref<1x3x128x8xbf16, #tpu.memory_space<vmem>>, vector<1x1x128x8xbf16>
    %70 = vector.shape_cast %69 : vector<1x1x128x8xbf16> to vector<128x8xbf16>
    %71 = arith.extf %70 : vector<128x8xbf16> to vector<128x8xf32>
    %cst_80 = arith.constant dense<0.000000e+00> : vector<8x8xf32>
    %72 = tpu.matmul %68, %71, %cst_80 {dimension_numbers = #tpu.dot_dimension_numbers<[1], [0], [0], [1], [0, 0, 1, 1], [], []>} : vector<8x128xf32>, vector<128x8xf32>, vector<8x8xf32> -> vector<8x8xf32>
    %c0_81 = arith.constant 0 : index
    %c1_82 = arith.constant 1 : index
    %c0_83 = arith.constant 0 : index
    %c0_84 = arith.constant 0 : index
    %73 = vector.load %arg7[%c0_81, %c1_82, %c0_83, %c0_84] : memref<1x3x1x8xf32, #tpu.memory_space<vmem>>, vector<1x1x1x8xf32>
    %74 = vector.shape_cast %73 : vector<1x1x1x8xf32> to vector<1x8xf32>
    %75 = vector.broadcast %74 : vector<1x8xf32> to vector<8x8xf32>
    %76 = arith.addf %72, %75 : vector<8x8xf32>
    %c0_85 = arith.constant 0 : index
    %c2 = arith.constant 2 : index
    %c0_86 = arith.constant 0 : index
    %c0_87 = arith.constant 0 : index
    %77 = vector.load %arg2[%c0_85, %c2, %c0_86, %c0_87] : memref<1x3x16x128xbf16, #tpu.memory_space<vmem>>, vector<1x1x16x128xbf16>
    %78 = vector.shape_cast %77 : vector<1x1x16x128xbf16> to vector<16x128xbf16>
    %79 = arith.extf %78 : vector<16x128xbf16> to vector<16x128xf32>
    %cst_88 = arith.constant dense<0.000000e+00> : vector<8x128xf32>
    %80 = tpu.matmul %0, %79, %cst_88 {dimension_numbers = #tpu.dot_dimension_numbers<[1], [0], [0], [1], [0, 0, 1, 1], [], []>} : vector<8x16xf32>, vector<16x128xf32>, vector<8x128xf32> -> vector<8x128xf32>
    %c0_89 = arith.constant 0 : index
    %c2_90 = arith.constant 2 : index
    %c0_91 = arith.constant 0 : index
    %c0_92 = arith.constant 0 : index
    %81 = vector.load %arg3[%c0_89, %c2_90, %c0_91, %c0_92] : memref<1x3x1x128xf32, #tpu.memory_space<vmem>>, vector<1x1x1x128xf32>
    %82 = vector.shape_cast %81 : vector<1x1x1x128xf32> to vector<1x128xf32>
    %83 = vector.broadcast %82 : vector<1x128xf32> to vector<8x128xf32>
    %84 = arith.addf %80, %83 : vector<8x128xf32>
    %cst_93 = arith.constant 0.000000e+00 : f32
    %85 = vector.broadcast %cst_93 : f32 to vector<8x128xf32>
    %86 = arith.maximumf %84, %85 : vector<8x128xf32>
    %c0_94 = arith.constant 0 : index
    %c2_95 = arith.constant 2 : index
    %c0_96 = arith.constant 0 : index
    %c0_97 = arith.constant 0 : index
    %c0_98 = arith.constant 0 : index
    %87 = vector.load %arg4[%c0_94, %c2_95, %c0_96, %c0_97, %c0_98] : memref<1x3x2x128x128xbf16, #tpu.memory_space<vmem>>, vector<1x1x1x128x128xbf16>
    %88 = vector.shape_cast %87 : vector<1x1x1x128x128xbf16> to vector<128x128xbf16>
    %89 = arith.extf %88 : vector<128x128xbf16> to vector<128x128xf32>
    %cst_99 = arith.constant dense<0.000000e+00> : vector<8x128xf32>
    %90 = tpu.matmul %86, %89, %cst_99 {dimension_numbers = #tpu.dot_dimension_numbers<[1], [0], [0], [1], [0, 0, 1, 1], [], []>} : vector<8x128xf32>, vector<128x128xf32>, vector<8x128xf32> -> vector<8x128xf32>
    %c0_100 = arith.constant 0 : index
    %c2_101 = arith.constant 2 : index
    %c0_102 = arith.constant 0 : index
    %c0_103 = arith.constant 0 : index
    %c0_104 = arith.constant 0 : index
    %91 = vector.load %arg5[%c0_100, %c2_101, %c0_102, %c0_103, %c0_104] : memref<1x3x2x1x128xf32, #tpu.memory_space<vmem>>, vector<1x1x1x1x128xf32>
    %92 = vector.shape_cast %91 : vector<1x1x1x1x128xf32> to vector<1x128xf32>
    %93 = vector.broadcast %92 : vector<1x128xf32> to vector<8x128xf32>
    %94 = arith.addf %90, %93 : vector<8x128xf32>
    %cst_105 = arith.constant 0.000000e+00 : f32
    %95 = vector.broadcast %cst_105 : f32 to vector<8x128xf32>
    %96 = arith.maximumf %94, %95 : vector<8x128xf32>
    %c0_106 = arith.constant 0 : index
    %c2_107 = arith.constant 2 : index
    %c1_108 = arith.constant 1 : index
    %c0_109 = arith.constant 0 : index
    %c0_110 = arith.constant 0 : index
    %97 = vector.load %arg4[%c0_106, %c2_107, %c1_108, %c0_109, %c0_110] : memref<1x3x2x128x128xbf16, #tpu.memory_space<vmem>>, vector<1x1x1x128x128xbf16>
    %98 = vector.shape_cast %97 : vector<1x1x1x128x128xbf16> to vector<128x128xbf16>
    %99 = arith.extf %98 : vector<128x128xbf16> to vector<128x128xf32>
    %cst_111 = arith.constant dense<0.000000e+00> : vector<8x128xf32>
    %100 = tpu.matmul %96, %99, %cst_111 {dimension_numbers = #tpu.dot_dimension_numbers<[1], [0], [0], [1], [0, 0, 1, 1], [], []>} : vector<8x128xf32>, vector<128x128xf32>, vector<8x128xf32> -> vector<8x128xf32>
    %c0_112 = arith.constant 0 : index
    %c2_113 = arith.constant 2 : index
    %c1_114 = arith.constant 1 : index
    %c0_115 = arith.constant 0 : index
    %c0_116 = arith.constant 0 : index
    %101 = vector.load %arg5[%c0_112, %c2_113, %c1_114, %c0_115, %c0_116] : memref<1x3x2x1x128xf32, #tpu.memory_space<vmem>>, vector<1x1x1x1x128xf32>
    %102 = vector.shape_cast %101 : vector<1x1x1x1x128xf32> to vector<1x128xf32>
    %103 = vector.broadcast %102 : vector<1x128xf32> to vector<8x128xf32>
    %104 = arith.addf %100, %103 : vector<8x128xf32>
    %cst_117 = arith.constant 0.000000e+00 : f32
    %105 = vector.broadcast %cst_117 : f32 to vector<8x128xf32>
    %106 = arith.maximumf %104, %105 : vector<8x128xf32>
    %c0_118 = arith.constant 0 : index
    %c2_119 = arith.constant 2 : index
    %c0_120 = arith.constant 0 : index
    %c0_121 = arith.constant 0 : index
    %107 = vector.load %arg6[%c0_118, %c2_119, %c0_120, %c0_121] : memref<1x3x128x8xbf16, #tpu.memory_space<vmem>>, vector<1x1x128x8xbf16>
    %108 = vector.shape_cast %107 : vector<1x1x128x8xbf16> to vector<128x8xbf16>
    %109 = arith.extf %108 : vector<128x8xbf16> to vector<128x8xf32>
    %cst_122 = arith.constant dense<0.000000e+00> : vector<8x8xf32>
    %110 = tpu.matmul %106, %109, %cst_122 {dimension_numbers = #tpu.dot_dimension_numbers<[1], [0], [0], [1], [0, 0, 1, 1], [], []>} : vector<8x128xf32>, vector<128x8xf32>, vector<8x8xf32> -> vector<8x8xf32>
    %c0_123 = arith.constant 0 : index
    %c2_124 = arith.constant 2 : index
    %c0_125 = arith.constant 0 : index
    %c0_126 = arith.constant 0 : index
    %111 = vector.load %arg7[%c0_123, %c2_124, %c0_125, %c0_126] : memref<1x3x1x8xf32, #tpu.memory_space<vmem>>, vector<1x1x1x8xf32>
    %112 = vector.shape_cast %111 : vector<1x1x1x8xf32> to vector<1x8xf32>
    %113 = vector.broadcast %112 : vector<1x8xf32> to vector<8x8xf32>
    %114 = arith.addf %110, %113 : vector<8x8xf32>
    %cst_127 = arith.constant 0.000000e+00 : f32
    %115 = vector.broadcast %cst_127 : f32 to vector<8x104xf32>
    %116 = tpu.concatenate %38, %76, %114, %115 in 1 : vector<8x8xf32>, vector<8x8xf32>, vector<8x8xf32>, vector<8x104xf32> -> vector<8x128xf32>
    %c0_128 = arith.constant 0 : index
    %c0_129 = arith.constant 0 : index
    %c0_130 = arith.constant 0 : index
    %117 = vector.load %arg8[%c0_128, %c0_129, %c0_130] : memref<1x8x128xf32, #tpu.memory_space<vmem>>, vector<1x8x128xf32>
    %118 = vector.shape_cast %117 : vector<1x8x128xf32> to vector<8x128xf32>
    %119 = vector.shape_cast %116 : vector<8x128xf32> to vector<1x8x128xf32>
    tpu.vector_store %arg8[%c0_128, %c0_129, %c0_130], %119 {strides = array<i32>} : memref<1x8x128xf32, #tpu.memory_space<vmem>>, vector<1x8x128xf32>,
    return
  }
  func.func @transform_0(%arg0: i32) -> (i32, i32) {
    %c0_i32 = arith.constant 0 : i32
    %c0_i32_0 = arith.constant 0 : i32
    %c0_i32_1 = arith.constant 0 : i32
    return %c0_i32, %c0_i32_0 : i32, i32
  }
  func.func @transform_1(%arg0: i32) -> (i32, i32, i32, i32) {
    %c0_i32 = arith.constant 0 : i32
    %c0_i32_0 = arith.constant 0 : i32
    %c0_i32_1 = arith.constant 0 : i32
    %c0_i32_2 = arith.constant 0 : i32
    return %arg0, %c0_i32, %c0_i32_0, %c0_i32_1 : i32, i32, i32, i32
  }
  func.func @transform_2(%arg0: i32) -> (i32, i32, i32, i32) {
    %c0_i32 = arith.constant 0 : i32
    %c0_i32_0 = arith.constant 0 : i32
    %c0_i32_1 = arith.constant 0 : i32
    %c0_i32_2 = arith.constant 0 : i32
    return %arg0, %c0_i32, %c0_i32_0, %c0_i32_1 : i32, i32, i32, i32
  }
  func.func @transform_3(%arg0: i32) -> (i32, i32, i32, i32, i32) {
    %c0_i32 = arith.constant 0 : i32
    %c0_i32_0 = arith.constant 0 : i32
    %c0_i32_1 = arith.constant 0 : i32
    %c0_i32_2 = arith.constant 0 : i32
    %c0_i32_3 = arith.constant 0 : i32
    return %arg0, %c0_i32, %c0_i32_0, %c0_i32_1, %c0_i32_2 : i32, i32, i32, i32, i32
  }
  func.func @transform_4(%arg0: i32) -> (i32, i32, i32, i32, i32) {
    %c0_i32 = arith.constant 0 : i32
    %c0_i32_0 = arith.constant 0 : i32
    %c0_i32_1 = arith.constant 0 : i32
    %c0_i32_2 = arith.constant 0 : i32
    %c0_i32_3 = arith.constant 0 : i32
    return %arg0, %c0_i32, %c0_i32_0, %c0_i32_1, %c0_i32_2 : i32, i32, i32, i32, i32
  }
  func.func @transform_5(%arg0: i32) -> (i32, i32, i32, i32) {
    %c0_i32 = arith.constant 0 : i32
    %c0_i32_0 = arith.constant 0 : i32
    %c0_i32_1 = arith.constant 0 : i32
    %c0_i32_2 = arith.constant 0 : i32
    return %arg0, %c0_i32, %c0_i32_0, %c0_i32_1 : i32, i32, i32, i32
  }
  func.func @transform_6(%arg0: i32) -> (i32, i32, i32, i32) {
    %c0_i32 = arith.constant 0 : i32
    %c0_i32_0 = arith.constant 0 : i32
    %c0_i32_1 = arith.constant 0 : i32
    %c0_i32_2 = arith.constant 0 : i32
    return %arg0, %c0_i32, %c0_i32_0, %c0_i32_1 : i32, i32, i32, i32
  }
  func.func @transform_7(%arg0: i32) -> (i32, i32, i32) {
    %c0_i32 = arith.constant 0 : i32
    %c0_i32_0 = arith.constant 0 : i32
    %c0_i32_1 = arith.constant 0 : i32
    return %arg0, %c0_i32, %c0_i32_0 : i32, i32, i32
  }
}

</mosaic_0001>

<llo_original>
// kernel: multi_dqn_forward.1
$region0: #{multi_dqn_forward.1}
  #allocation0 [shape = 'u32[]', space=smem, size = 0x4, offset = 0x4, fixed_abs, tag = 'smem constant byte address 0x4 - core index']
  #allocation1 [shape = 'u32[144,128]{1,0:T(1,128)}', space=vmem, size = 0x12000, scoped, tag = 'internal scratch']
  %s0 = inlined_call_operand.vmem [shape: f32[8,16], index: 0, kind: input, shape index: {}]
  %s1 = inlined_call_operand.vmem [shape: bf16[2,3,16,128], index: 1, kind: input, shape index: {}]
  %s2 = inlined_call_operand.vmem [shape: f32[2,3,1,128], index: 2, kind: input, shape index: {}]
  %s3 = inlined_call_operand.hbm [shape: bf16[2,3,2,128,128], index: 3, kind: input, shape index: {}]
  %s4 = inlined_call_operand.vmem [shape: f32[2,3,2,1,128], index: 4, kind: input, shape index: {}]
  %s5 = inlined_call_operand.vmem [shape: bf16[2,3,128,8], index: 5, kind: input, shape index: {}]
  %s6 = inlined_call_operand.vmem [shape: f32[2,3,1,8], index: 6, kind: input, shape index: {}]
  %s7 = inlined_call_operand.vmem [shape: f32[2,8,128], index: 7, kind: output, shape index: {}]
  %s8 = sld [smem:[#allocation0]]
  $region65: #{multi_dqn_forward.1} parent=0
    _
  %s10 = ssub.s32 1, %s8
  %s11 = scalar_select 0, %s10, %s8
  $region1: #{multi_dqn_forward.1} parent=0
    #allocation2 [shape = 'u8[393216]{0}', space=vmem, size = 0x60000, scoped, tag = 'input window, operand 3']
    #allocation3 [shape = 's32[2]{0}', space=sflag, size = 0x8, scoped, tag = 'scoped memory for multi_dqn_forward.1']
    %12 = vsyncpa [#allocation3], 0
    %s13 = scalar_lea.sflag [#allocation3], 1
    %14 = vsyncpa %s13, 0
    loop: start=0, step=1, limit=4
    $region2: #{multi_dqn_forward.1} parent=1 // loop_pre_header
      _
    $region3: #{multi_dqn_forward.1} parent=1 // loop_header
      %s16 = sphi 0, %s20
      %p17 = scmp.ge.s32.totalorder %s16, 4
      %s24 = sphi 0, %s24
      %s26 = sphi 0, %s24
      %s27 = sphi 0, %s26
      %s41 = sphi 0, %s27
      %s47 = sphi 0, %s49
      %s50 = sphi 0, %s47
      %s51 = sphi 0, %s50
      %s67 = sphi 0, %s51
      %s73 = sphi 0, %s75
      %s76 = sphi 0, %s73
      %s77 = sphi 0, %s76
      %s93 = sphi 0, %s77
      %s99 = sphi 0, %s101
      %s102 = sphi 0, %s99
      %s103 = sphi 0, %s102
      %s119 = sphi 0, %s103
      %s125 = sphi 0, %s127
      %s128 = sphi 0, %s125
      %s129 = sphi 0, %s128
      %s145 = sphi 0, %s129
      %s151 = sphi 0, %s153
      %s154 = sphi 0, %s151
      %s155 = sphi 0, %s154
      %s171 = sphi 0, %s155
      %s177 = sphi 0, %s179
      %s180 = sphi 0, %s177
      %s181 = sphi 0, %s180
      %s197 = sphi 0, %s181
      %s203 = sphi 0, %s205
      %s206 = sphi 0, %s203
      %s207 = sphi 0, %s206
      %s223 = sphi 0, %s207
    $region4: #{multi_dqn_forward.1} parent=1 // loop_header_branch
      %19 = sbr.rel (%p17) target = $region8
    $region5: #{multi_dqn_forward.1} parent=1 // loop_body
      %s21 = ssub.s32 %s16, 1
      %s22 = ssub.s32 %s16, 2
      %s23 = sadd.s32 %s16, 1
      %s25 = sadd.s32 %s24, 1
      %p28 = scmp.eq.s32.totalorder %s16, 1
      %p29 = scmp.ne.s32.totalorder %s24, %s26
      %p30 = scmp.eq.s32.totalorder %s16, 0
      %p31 = por %p29, %p30
      %p32 = scmp.ne.s32.totalorder %s24, %s26
      %p33 = scmp.eq.s32.totalorder %s21, 1
      %p34 = por %p32, %p33
      %p35 = scmp.ne.s32.totalorder %s26, %s27
      %p36 = scmp.eq.s32.totalorder %s21, 0
      %p37 = por %p35, %p36
      %p38 = scmp.ne.s32.totalorder %s26, %s27
      %p39 = scmp.eq.s32.totalorder %s22, 1
      %p40 = por %p38, %p39
      %p42 = scmp.ne.s32.totalorder %s27, %s41
      %p43 = scmp.eq.s32.totalorder %s22, 0
      %p44 = por %p42, %p43
      %s45 = ssub.s32 %s16, %s23
      %p46 = scmp.eq.s32.totalorder %s45, 0
      %s48 = sadd.s32 %s47, 1
      %s49 = scalar_select %p46, %s47, %s48
      %p52 = pneg %p46
      %p53 = scmp.eq.s32.totalorder %s16, 1
      %p54 = por %p52, %p53
      %p55 = scmp.ne.s32.totalorder %s47, %s50
      %p56 = scmp.eq.s32.totalorder %s16, 0
      %p57 = por %p55, %p56
      %p58 = scmp.ne.s32.totalorder %s47, %s50
      %p59 = scmp.eq.s32.totalorder %s21, 1
      %p60 = por %p58, %p59
      %p61 = scmp.ne.s32.totalorder %s50, %s51
      %p62 = scmp.eq.s32.totalorder %s21, 0
      %p63 = por %p61, %p62
      %p64 = scmp.ne.s32.totalorder %s50, %s51
      %p65 = scmp.eq.s32.totalorder %s22, 1
      %p66 = por %p64, %p65
      %p68 = scmp.ne.s32.totalorder %s51, %s67
      %p69 = scmp.eq.s32.totalorder %s22, 0
      %p70 = por %p68, %p69
      %s71 = ssub.s32 %s16, %s23
      %p72 = scmp.eq.s32.totalorder %s71, 0
      %s74 = sadd.s32 %s73, 1
      %s75 = scalar_select %p72, %s73, %s74
      %p78 = pneg %p72
      %p79 = scmp.eq.s32.totalorder %s16, 1
      %p80 = por %p78, %p79
      %p81 = scmp.ne.s32.totalorder %s73, %s76
      %p82 = scmp.eq.s32.totalorder %s16, 0
      %p83 = por %p81, %p82
      %p84 = scmp.ne.s32.totalorder %s73, %s76
      %p85 = scmp.eq.s32.totalorder %s21, 1
      %p86 = por %p84, %p85
      %p87 = scmp.ne.s32.totalorder %s76, %s77
      %p88 = scmp.eq.s32.totalorder %s21, 0
      %p89 = por %p87, %p88
      %p90 = scmp.ne.s32.totalorder %s76, %s77
      %p91 = scmp.eq.s32.totalorder %s22, 1
      %p92 = por %p90, %p91
      %p94 = scmp.ne.s32.totalorder %s77, %s93
      %p95 = scmp.eq.s32.totalorder %s22, 0
      %p96 = por %p94, %p95
      %s97 = ssub.s32 %s16, %s23
      %p98 = scmp.eq.s32.totalorder %s97, 0
      %s100 = sadd.s32 %s99, 1
      %s101 = scalar_select %p98, %s99, %s100
      %p104 = pneg %p98
      %p105 = scmp.eq.s32.totalorder %s16, 1
      %p106 = por %p104, %p105
      %p107 = scmp.ne.s32.totalorder %s99, %s102
      %p108 = scmp.eq.s32.totalorder %s16, 0
      %p109 = por %p107, %p108
      %p110 = scmp.ne.s32.totalorder %s99, %s102
      %p111 = scmp.eq.s32.totalorder %s21, 1
      %p112 = por %p110, %p111
      %p113 = scmp.ne.s32.totalorder %s102, %s103
      %p114 = scmp.eq.s32.totalorder %s21, 0
      %p115 = por %p113, %p114
      %p116 = scmp.ne.s32.totalorder %s102, %s103
      %p117 = scmp.eq.s32.totalorder %s22, 1
      %p118 = por %p116, %p117
      %p120 = scmp.ne.s32.totalorder %s103, %s119
      %p121 = scmp.eq.s32.totalorder %s22, 0
      %p122 = por %p120, %p121
      %s123 = ssub.s32 %s16, %s23
      %p124 = scmp.eq.s32.totalorder %s123, 0
      %s126 = sadd.s32 %s125, 1
      %s127 = scalar_select %p124, %s125, %s126
      %p130 = pneg %p124
      %p131 = scmp.eq.s32.totalorder %s16, 1
      %p132 = por %p130, %p131
      %p133 = scmp.ne.s32.totalorder %s125, %s128
      %p134 = scmp.eq.s32.totalorder %s16, 0
      %p135 = por %p133, %p134
      %p136 = scmp.ne.s32.totalorder %s125, %s128
      %p137 = scmp.eq.s32.totalorder %s21, 1
      %p138 = por %p136, %p137
      %p139 = scmp.ne.s32.totalorder %s128, %s129
      %p140 = scmp.eq.s32.totalorder %s21, 0
      %p141 = por %p139, %p140
      %p142 = scmp.ne.s32.totalorder %s128, %s129
      %p143 = scmp.eq.s32.totalorder %s22, 1
      %p144 = por %p142, %p143
      %p146 = scmp.ne.s32.totalorder %s129, %s145
      %p147 = scmp.eq.s32.totalorder %s22, 0
      %p148 = por %p146, %p147
      %s149 = ssub.s32 %s16, %s23
      %p150 = scmp.eq.s32.totalorder %s149, 0
      %s152 = sadd.s32 %s151, 1
      %s153 = scalar_select %p150, %s151, %s152
      %p156 = pneg %p150
      %p157 = scmp.eq.s32.totalorder %s16, 1
      %p158 = por %p156, %p157
      %p159 = scmp.ne.s32.totalorder %s151, %s154
      %p160 = scmp.eq.s32.totalorder %s16, 0
      %p161 = por %p159, %p160
      %p162 = scmp.ne.s32.totalorder %s151, %s154
      %p163 = scmp.eq.s32.totalorder %s21, 1
      %p164 = por %p162, %p163
      %p165 = scmp.ne.s32.totalorder %s154, %s155
      %p166 = scmp.eq.s32.totalorder %s21, 0
      %p167 = por %p165, %p166
      %p168 = scmp.ne.s32.totalorder %s154, %s155
      %p169 = scmp.eq.s32.totalorder %s22, 1
      %p170 = por %p168, %p169
      %p172 = scmp.ne.s32.totalorder %s155, %s171
      %p173 = scmp.eq.s32.totalorder %s22, 0
      %p174 = por %p172, %p173
      %s175 = ssub.s32 %s16, %s23
      %p176 = scmp.eq.s32.totalorder %s175, 0
      %s178 = sadd.s32 %s177, 1
      %s179 = scalar_select %p176, %s177, %s178
      %p182 = pneg %p176
      %p183 = scmp.eq.s32.totalorder %s16, 1
      %p184 = por %p182, %p183
      %p185 = scmp.ne.s32.totalorder %s177, %s180
      %p186 = scmp.eq.s32.totalorder %s16, 0
      %p187 = por %p185, %p186
      %p188 = scmp.ne.s32.totalorder %s177, %s180
      %p189 = scmp.eq.s32.totalorder %s21, 1
      %p190 = por %p188, %p189
      %p191 = scmp.ne.s32.totalorder %s180, %s181
      %p192 = scmp.eq.s32.totalorder %s21, 0
      %p193 = por %p191, %p192
      %p194 = scmp.ne.s32.totalorder %s180, %s181
      %p195 = scmp.eq.s32.totalorder %s22, 1
      %p196 = por %p194, %p195
      %p198 = scmp.ne.s32.totalorder %s181, %s197
      %p199 = scmp.eq.s32.totalorder %s22, 0
      %p200 = por %p198, %p199
      %s201 = ssub.s32 %s16, %s23
      %p202 = scmp.eq.s32.totalorder %s201, 0
      %s204 = sadd.s32 %s203, 1
      %s205 = scalar_select %p202, %s203, %s204
      %p208 = pneg %p202
      %p209 = scmp.eq.s32.totalorder %s16, 1
      %p210 = por %p208, %p209
      %p211 = scmp.ne.s32.totalorder %s203, %s206
      %p212 = scmp.eq.s32.totalorder %s16, 0
      %p213 = por %p211, %p212
      %p214 = scmp.ne.s32.totalorder %s203, %s206
      %p215 = scmp.eq.s32.totalorder %s21, 1
      %p216 = por %p214, %p215
      %p217 = scmp.ne.s32.totalorder %s206, %s207
      %p218 = scmp.eq.s32.totalorder %s21, 0
      %p219 = por %p217, %p218
      %p220 = scmp.ne.s32.totalorder %s206, %s207
      %p221 = scmp.eq.s32.totalorder %s22, 1
      %p222 = por %p220, %p221
      %p224 = scmp.ne.s32.totalorder %s207, %s223
      %p225 = scmp.eq.s32.totalorder %s22, 0
      %p226 = por %p224, %p225
      %p227 = scmp.le.s32.totalorder 1, %s16
      %p228 = scmp.lt.s32.totalorder %s16, 3
      %p229 = pnand %p227, %p228
      %p230 = pneg %p229
      // Predicated region
      $region9: #{multi_dqn_forward.1} parent=5 // pred_check
        _
      $region10: #{multi_dqn_forward.1} parent=5 // pred_check_branch
        %232 = sbr.rel (%p229) target = $region12
      $region11: #{multi_dqn_forward.1} parent=5 // pred_region
        %s233 = ssub.s32 %s16, 1
        // Predicated region
        $region13: #{multi_dqn_forward.1} parent=11 // pred_check
          %p234 = pneg %p37
        $region14: #{multi_dqn_forward.1} parent=11 // pred_check_branch
          %236 = sbr.rel (%p234) target = $region16
        $region15: #{multi_dqn_forward.1} parent=11 // pred_region
          _
        $region16: #{multi_dqn_forward.1} parent=11 // pred_fallthru
          _
      $region12: #{multi_dqn_forward.1} parent=5 // pred_fallthru
        _
      %p237 = scmp.lt.s32.totalorder %s16, 2
      // Predicated region
      $region17: #{multi_dqn_forward.1} parent=5 // pred_check
        %p238 = pneg %p237
      $region18: #{multi_dqn_forward.1} parent=5 // pred_check_branch
        %240 = sbr.rel (%p238) target = $region20
      $region19: #{multi_dqn_forward.1} parent=5 // pred_region
        // Predicated region
        $region21: #{multi_dqn_forward.1} parent=19 // pred_check
          %p241 = pneg %p57
        $region22: #{multi_dqn_forward.1} parent=19 // pred_check_branch
          %243 = sbr.rel (%p241) target = $region24
        $region23: #{multi_dqn_forward.1} parent=19 // pred_region
          %p244 = scmp.lt.s32.totalorder %s16, 1
          %s245 = scalar_select %p244, %s16, 1
          %s246 = smul.addr %s245, 6
          %s247 = smul.addr %s246, 4
          %s248 = scalar_lea.vmem %s1, %s247
        $region24: #{multi_dqn_forward.1} parent=19 // pred_fallthru
          _
        // Predicated region
        $region25: #{multi_dqn_forward.1} parent=19 // pred_check
          %p249 = pneg %p83
        $region26: #{multi_dqn_forward.1} parent=19 // pred_check_branch
          %251 = sbr.rel (%p249) target = $region28
        $region27: #{multi_dqn_forward.1} parent=19 // pred_region
          %p252 = scmp.lt.s32.totalorder %s16, 1
          %s253 = scalar_select %p252, %s16, 1
          %s254 = smul.addr %s253, 3
          %s255 = scalar_lea.vmem %s2, %s254
        $region28: #{multi_dqn_forward.1} parent=19 // pred_fallthru
          _
        // Predicated region
        $region29: #{multi_dqn_forward.1} parent=19 // pred_check
          %p256 = pneg %p109
        $region30: #{multi_dqn_forward.1} parent=19 // pred_check_branch
          %258 = sbr.rel (%p256) target = $region32
        $region31: #{multi_dqn_forward.1} parent=19 // pred_region
          %s259 = sand.u32 %s99, 1
          %s260 = scalar_lea.sflag [#allocation3], %s259
          %s261 = sand.u32 %s99, 1
          %s262 = smul.addr %s261, 384
          %s263 = scalar_lea.vmem [#allocation2], %s262
          %s265 = ssub.s32 6144, 6144
          %266 = vsyncadd %s260, %s265
          %s267 = smul.addr %s16, 96
          %s268 = smul.addr %s267, 64
          %s269 = scalar_lea.hbm %s3, %s268
          %s270 = sshll.u32 %s263, 4
          %s271 = int_to_ptr.vmem [resolvable:$true] %s270
          %276 = dma.hbm_to_vmem [thread:$0]  %s269, 6144, %s271, %s260, 64, 64, 4
        $region32: #{multi_dqn_forward.1} parent=19 // pred_fallthru
          _
        // Predicated region
        $region33: #{multi_dqn_forward.1} parent=19 // pred_check
          %p277 = pneg %p135
        $region34: #{multi_dqn_forward.1} parent=19 // pred_check_branch
          %279 = sbr.rel (%p277) target = $region36
        $region35: #{multi_dqn_forward.1} parent=19 // pred_region
          %p280 = scmp.lt.s32.totalorder %s16, 1
          %s281 = scalar_select %p280, %s16, 1
          %s282 = smul.addr %s281, 6
          %s283 = scalar_lea.vmem %s4, %s282
        $region36: #{multi_dqn_forward.1} parent=19 // pred_fallthru
          _
        // Predicated region
        $region37: #{multi_dqn_forward.1} parent=19 // pred_check
          %p284 = pneg %p161
        $region38: #{multi_dqn_forward.1} parent=19 // pred_check_branch
          %286 = sbr.rel (%p284) target = $region40
        $region39: #{multi_dqn_forward.1} parent=19 // pred_region
          %p287 = scmp.lt.s32.totalorder %s16, 1
          %s288 = scalar_select %p287, %s16, 1
          %s289 = smul.addr %s288, 48
          %s290 = smul.addr %s289, 4
          %s291 = scalar_lea.vmem %s5, %s290
        $region40: #{multi_dqn_forward.1} parent=19 // pred_fallthru
          _
        // Predicated region
        $region41: #{multi_dqn_forward.1} parent=19 // pred_check
          %p292 = pneg %p187
        $region42: #{multi_dqn_forward.1} parent=19 // pred_check_branch
          %294 = sbr.rel (%p292) target = $region44
        $region43: #{multi_dqn_forward.1} parent=19 // pred_region
          %p295 = scmp.lt.s32.totalorder %s16, 1
          %s296 = scalar_select %p295, %s16, 1
          %s297 = smul.addr %s296, 3
          %s298 = scalar_lea.vmem %s6, %s297
        $region44: #{multi_dqn_forward.1} parent=19 // pred_fallthru
          _
      $region20: #{multi_dqn_forward.1} parent=5 // pred_fallthru
        _
      %p299 = scmp.le.s32.totalorder 1, %s16
      %p300 = scmp.lt.s32.totalorder %s16, 3
      %p301 = pnand %p299, %p300
      %p302 = pneg %p301
      // Predicated region
      $region45: #{multi_dqn_forward.1} parent=5 // pred_check
        _
      $region46: #{multi_dqn_forward.1} parent=5 // pred_check_branch
        %304 = sbr.rel (%p301) target = $region48
      $region47: #{multi_dqn_forward.1} parent=5 // pred_region
        %s305 = ssub.s32 %s16, 1
        %s306 = sand.u32 %s102, 1
        %s307 = scalar_lea.sflag [#allocation3], %s306
        %s308 = sand.u32 %s102, 1
        %s309 = smul.addr %s308, 384
        %s310 = scalar_lea.vmem [#allocation2], %s309
        // Predicated region
        $region49: #{multi_dqn_forward.1} parent=47 // pred_check
          %p311 = pneg %p115
        $region50: #{multi_dqn_forward.1} parent=47 // pred_check_branch
          %313 = sbr.rel (%p311) target = $region52
        $region51: #{multi_dqn_forward.1} parent=47 // pred_region
          %314 = dma.done %s307, 6144
        $region52: #{multi_dqn_forward.1} parent=47 // pred_fallthru
          _
        %p315 = pneg %p37
        %p316 = pneg %p34
        %p317 = scmp.lt.s32.totalorder %s21, 1
        %s318 = scalar_select %p317, %s21, 1
        %s319 = smul.addr %s318, 6
        %s320 = smul.addr %s319, 4
        %s321 = scalar_lea.vmem %s1, %s320
        %p322 = pneg %p63
        %p323 = pneg %p60
        %p324 = scmp.lt.s32.totalorder %s21, 1
        %s325 = scalar_select %p324, %s21, 1
        %s326 = smul.addr %s325, 3
        %s327 = scalar_lea.vmem %s2, %s326
        %p328 = pneg %p89
        %p329 = pneg %p86
        %s330 = sand.u32 %s102, 1
        %s331 = scalar_lea.sflag [#allocation3], %s330
        %s332 = sand.u32 %s102, 1
        %s333 = smul.addr %s332, 384
        %s334 = scalar_lea.vmem [#allocation2], %s333
        %p335 = pneg %p115
        %p336 = pneg %p112
        %p337 = scmp.lt.s32.totalorder %s21, 1
        %s338 = scalar_select %p337, %s21, 1
        %s339 = smul.addr %s338, 6
        %s340 = scalar_lea.vmem %s4, %s339
        %p341 = pneg %p141
        %p342 = pneg %p138
        %p343 = scmp.lt.s32.totalorder %s21, 1
        %s344 = scalar_select %p343, %s21, 1
        %s345 = smul.addr %s344, 48
        %s346 = smul.addr %s345, 4
        %s347 = scalar_lea.vmem %s5, %s346
        %p348 = pneg %p167
        %p349 = pneg %p164
        %p350 = scmp.lt.s32.totalorder %s21, 1
        %s351 = scalar_select %p350, %s21, 1
        %s352 = smul.addr %s351, 3
        %s353 = scalar_lea.vmem %s6, %s352
        %p354 = pneg %p193
        %p355 = pneg %p190
        %p356 = pneg %p219
        %p357 = pneg %p216
        %p358 = scmp.lt.s32.totalorder %s21, 1
        %s359 = scalar_select %p358, %s21, 1
        %s360 = smul.addr %s359, 8
        %s361 = scalar_lea.vmem %s7, %s360
        %p362 = scmp.lt.s32.totalorder %s21, 1
        %s363 = scalar_select %p362, %s21, 1
        %s364 = smul.addr %s363, 6
        %s365 = smul.addr %s364, 4
        %s366 = scalar_lea.vmem %s1, %s365
        %p367 = scmp.lt.s32.totalorder %s21, 1
        %s368 = scalar_select %p367, %s21, 1
        %s369 = smul.addr %s368, 3
        %s370 = scalar_lea.vmem %s2, %s369
        %p371 = scmp.lt.s32.totalorder %s21, 1
        %s372 = scalar_select %p371, %s21, 1
        %s373 = smul.addr %s372, 6
        %s374 = scalar_lea.vmem %s4, %s373
        %p375 = scmp.lt.s32.totalorder %s21, 1
        %s376 = scalar_select %p375, %s21, 1
        %s377 = smul.addr %s376, 48
        %s378 = smul.addr %s377, 4
        %s379 = scalar_lea.vmem %s5, %s378
        %p380 = scmp.lt.s32.totalorder %s21, 1
        %s381 = scalar_select %p380, %s21, 1
        %s382 = smul.addr %s381, 3
        %s383 = scalar_lea.vmem %s6, %s382
        %p384 = scmp.lt.s32.totalorder %s21, 1
        %s385 = scalar_select %p384, %s21, 1
        %s386 = smul.addr %s385, 8
        %s387 = scalar_lea.vmem %s7, %s386
        %v388 = vld [vmem:[%s0] sm:$0xff]
        %v389 = vld [vmem:[%s366] sm:$0xf]
        %v390 = vld [vmem:[%s366 + $0x4] sm:$0xf]
        %v391 = vunpack.c.l.bf16 %v389
        %v392 = vunpack.c.l.bf16 %v390
        %v393 = vld [vmem:[%s370] sm:$0x1]
        %v395 = vlaneseq
        %v396 = vshrl.u32 %v395, 7
        %v397 = vsub.s32 0, %v396
        %v398 = vrot.slane %v393, %v397
        %vm400 = vcmask 130048
        %v402 = vsel %vm400, %v388, 0
        %404 = vmatprep.subr.mxu0 0.0
        %405 = vmatpush1.msra.mxu0 %v391
        %406 = vmatprep.subr.mxu0 0.0
        %407 = vmatpush1.msra.mxu0 %v392
        %408 = vmatprep.subr.mxu0 0.0
        %409 = vmatpush1.msra.mxu0 0.0
        %410 = vmatprep.subr.mxu0 0.0
        %411 = vmatpush1.msra.mxu0 0.0
        %412 = vmatprep.subr.mxu0 0.0
        %413 = vmatpush1.msra.mxu0 0.0
        %414 = vmatprep.subr.mxu0 0.0
        %415 = vmatpush1.msra.mxu0 0.0
        %416 = vmatprep.subr.mxu0 0.0
        %417 = vmatpush1.msra.mxu0 0.0
        %418 = vmatprep.subr.mxu0 0.0
        %419 = vmatpush1.msra.mxu0 0.0
        %420 = vmatprep.subr.mxu0 0.0
        %421 = vmatpush1.msra.mxu0 0.0
        %422 = vmatprep.subr.mxu0 0.0
        %423 = vmatpush1.msra.mxu0 0.0
        %424 = vmatprep.subr.mxu0 0.0
        %425 = vmatpush1.msra.mxu0 0.0
        %426 = vmatprep.subr.mxu0 0.0
        %427 = vmatpush1.msra.mxu0 0.0
        %428 = vmatprep.subr.mxu0 0.0
        %429 = vmatpush1.msra.mxu0 0.0
        %430 = vmatprep.subr.mxu0 0.0
        %431 = vmatpush1.msra.mxu0 0.0
        %432 = vmatprep.subr.mxu0 0.0
        %433 = vmatpush1.msra.mxu0 0.0
        %434 = vmatprep.subr.mxu0 0.0
        %435 = vmatpush1.msra.mxu0 0.0
        %436 = vmatprep.subr.mxu0 0.0
        %437 = vmatpush1.msra.mxu0 0.0
        %438 = vmatprep.subr.mxu0 0.0
        %439 = vmatpush1.msra.mxu0 0.0
        %440 = vmatprep.subr.mxu0 0.0
        %441 = vmatpush1.msra.mxu0 0.0
        %442 = vmatprep.subr.mxu0 0.0
        %443 = vmatpush1.msra.mxu0 0.0
        %444 = vmatprep.subr.mxu0 0.0
        %445 = vmatpush1.msra.mxu0 0.0
        %446 = vmatprep.subr.mxu0 0.0
        %447 = vmatpush1.msra.mxu0 0.0
        %448 = vmatprep.subr.mxu0 0.0
        %449 = vmatpush1.msra.mxu0 0.0
        %450 = vmatprep.subr.mxu0 0.0
        %451 = vmatpush1.msra.mxu0 0.0
        %452 = vmatprep.subr.mxu0 0.0
        %453 = vmatpush1.msra.mxu0 0.0
        %454 = vmatprep.subr.mxu0 0.0
        %455 = vmatpush1.msra.mxu0 0.0
        %456 = vmatprep.subr.mxu0 0.0
        %457 = vmatpush1.msra.mxu0 0.0
        %458 = vmatprep.subr.mxu0 0.0
        %459 = vmatpush1.msra.mxu0 0.0
        %460 = vmatprep.subr.mxu0 0.0
        %461 = vmatpush1.msra.mxu0 0.0
        %462 = vmatprep.subr.mxu0 0.0
        %463 = vmatpush1.msra.mxu0 0.0
        %464 = vmatprep.subr.mxu0 0.0
        %465 = vmatpush1.msra.mxu0 0.0
        %466 = vmatprep.subr.mxu0 0.0
        %467 = vmatpush1.msra.mxu0 0.0
        %468 = vmatprep.mubr.f32.mxu0 0.0
        %469 = vmatmul.mubr.f32.gmra.mrb[0].mxu0 %v402
        %v470 = vpop.f32.mrb[0].mxu0
        %v471 = vadd.f32 %v398, %v470
        %v472 = vpop.f32.mrb[0].mxu0
        %473 = vdwg.mxu0
        %v474 = vmax.f32 %v471, 0.0
        %v475 = vld [vmem:[%s310] sm:$0xf]
        %v476 = vld [vmem:[%s310 + $0x4] sm:$0xf]
        %v477 = vld [vmem:[%s310 + $0x8] sm:$0xf]
        %v478 = vld [vmem:[%s310 + $0xc] sm:$0xf]
        %v479 = vld [vmem:[%s310 + $0x10] sm:$0xf]
        %v480 = vld [vmem:[%s310 + $0x14] sm:$0xf]
        %v481 = vld [vmem:[%s310 + $0x18] sm:$0xf]
        %v482 = vld [vmem:[%s310 + $0x1c] sm:$0xf]
        %v483 = vld [vmem:[%s310 + $0x20] sm:$0xf]
        %v484 = vld [vmem:[%s310 + $0x24] sm:$0xf]
        %v485 = vld [vmem:[%s310 + $0x28] sm:$0xf]
        %v486 = vld [vmem:[%s310 + $0x2c] sm:$0xf]
        %v487 = vld [vmem:[%s310 + $0x30] sm:$0xf]
        %v488 = vld [vmem:[%s310 + $0x34] sm:$0xf]
        %v489 = vld [vmem:[%s310 + $0x38] sm:$0xf]
        %v490 = vld [vmem:[%s310 + $0x3c] sm:$0xf]
        %v491 = vunpack.c.l.bf16 %v475
        %v492 = vunpack.c.l.bf16 %v476
        %v493 = vunpack.c.l.bf16 %v477
        %v494 = vunpack.c.l.bf16 %v478
        %v495 = vunpack.c.l.bf16 %v479
        %v496 = vunpack.c.l.bf16 %v480
        %v497 = vunpack.c.l.bf16 %v481
        %v498 = vunpack.c.l.bf16 %v482
        %v499 = vunpack.c.l.bf16 %v483
        %v500 = vunpack.c.l.bf16 %v484
        %v501 = vunpack.c.l.bf16 %v485
        %v502 = vunpack.c.l.bf16 %v486
        %v503 = vunpack.c.l.bf16 %v487
        %v504 = vunpack.c.l.bf16 %v488
        %v505 = vunpack.c.l.bf16 %v489
        %v506 = vunpack.c.l.bf16 %v490
        %v507 = vld [vmem:[%s374] sm:$0x1]
        %v509 = vlaneseq
        %v510 = vshrl.u32 %v509, 7
        %v511 = vsub.s32 0, %v510
        %v512 = vrot.slane %v507, %v511
        %514 = vmatprep.subr.mxu0 0.0
        %515 = vmatpush1.msra.mxu0 %v491
        %516 = vmatprep.subr.mxu0 0.0
        %517 = vmatpush1.msra.mxu0 %v492
        %518 = vmatprep.subr.mxu0 0.0
        %519 = vmatpush1.msra.mxu0 %v493
        %520 = vmatprep.subr.mxu0 0.0
        %521 = vmatpush1.msra.mxu0 %v494
        %522 = vmatprep.subr.mxu0 0.0
        %523 = vmatpush1.msra.mxu0 %v495
        %524 = vmatprep.subr.mxu0 0.0
        %525 = vmatpush1.msra.mxu0 %v496
        %526 = vmatprep.subr.mxu0 0.0
        %527 = vmatpush1.msra.mxu0 %v497
        %528 = vmatprep.subr.mxu0 0.0
        %529 = vmatpush1.msra.mxu0 %v498
        %530 = vmatprep.subr.mxu0 0.0
        %531 = vmatpush1.msra.mxu0 %v499
        %532 = vmatprep.subr.mxu0 0.0
        %533 = vmatpush1.msra.mxu0 %v500
        %534 = vmatprep.subr.mxu0 0.0
        %535 = vmatpush1.msra.mxu0 %v501
        %536 = vmatprep.subr.mxu0 0.0
        %537 = vmatpush1.msra.mxu0 %v502
        %538 = vmatprep.subr.mxu0 0.0
        %539 = vmatpush1.msra.mxu0 %v503
        %540 = vmatprep.subr.mxu0 0.0
        %541 = vmatpush1.msra.mxu0 %v504
        %542 = vmatprep.subr.mxu0 0.0
        %543 = vmatpush1.msra.mxu0 %v505
        %544 = vmatprep.subr.mxu0 0.0
        %545 = vmatpush1.msra.mxu0 %v506
        %546 = vmatprep.subr.mxu0 0.0
        %547 = vmatpush1.msra.mxu0 0.0
        %548 = vmatprep.subr.mxu0 0.0
        %549 = vmatpush1.msra.mxu0 0.0
        %550 = vmatprep.subr.mxu0 0.0
        %551 = vmatpush1.msra.mxu0 0.0
        %552 = vmatprep.subr.mxu0 0.0
        %553 = vmatpush1.msra.mxu0 0.0
        %554 = vmatprep.subr.mxu0 0.0
        %555 = vmatpush1.msra.mxu0 0.0
        %556 = vmatprep.subr.mxu0 0.0
        %557 = vmatpush1.msra.mxu0 0.0
        %558 = vmatprep.subr.mxu0 0.0
        %559 = vmatpush1.msra.mxu0 0.0
        %560 = vmatprep.subr.mxu0 0.0
        %561 = vmatpush1.msra.mxu0 0.0
        %562 = vmatprep.subr.mxu0 0.0
        %563 = vmatpush1.msra.mxu0 0.0
        %564 = vmatprep.subr.mxu0 0.0
        %565 = vmatpush1.msra.mxu0 0.0
        %566 = vmatprep.subr.mxu0 0.0
        %567 = vmatpush1.msra.mxu0 0.0
        %568 = vmatprep.subr.mxu0 0.0
        %569 = vmatpush1.msra.mxu0 0.0
        %570 = vmatprep.subr.mxu0 0.0
        %571 = vmatpush1.msra.mxu0 0.0
        %572 = vmatprep.subr.mxu0 0.0
        %573 = vmatpush1.msra.mxu0 0.0
        %574 = vmatprep.subr.mxu0 0.0
        %575 = vmatpush1.msra.mxu0 0.0
        %576 = vmatprep.subr.mxu0 0.0
        %577 = vmatpush1.msra.mxu0 0.0
        %578 = vmatprep.mubr.f32.mxu0 0.0
        %579 = vmatmul.mubr.f32.gmra.mrb[0].mxu0 %v474
        %v580 = vpop.f32.mrb[0].mxu0
        %v581 = vadd.f32 %v512, %v580
        %v582 = vpop.f32.mrb[0].mxu0
        %583 = vdwg.mxu0
        %v584 = vmax.f32 %v581, 0.0
        %s585 = scalar_lea.vmem %s310, 64 [#allocation2]
        %v586 = vld [vmem:[%s585] sm:$0xf]
        %v587 = vld [vmem:[%s585 + $0x4] sm:$0xf]
        %v588 = vld [vmem:[%s585 + $0x8] sm:$0xf]
        %v589 = vld [vmem:[%s585 + $0xc] sm:$0xf]
        %v590 = vld [vmem:[%s585 + $0x10] sm:$0xf]
        %v591 = vld [vmem:[%s585 + $0x14] sm:$0xf]
        %v592 = vld [vmem:[%s585 + $0x18] sm:$0xf]
        %v593 = vld [vmem:[%s585 + $0x1c] sm:$0xf]
        %v594 = vld [vmem:[%s585 + $0x20] sm:$0xf]
        %v595 = vld [vmem:[%s585 + $0x24] sm:$0xf]
        %v596 = vld [vmem:[%s585 + $0x28] sm:$0xf]
        %v597 = vld [vmem:[%s585 + $0x2c] sm:$0xf]
        %v598 = vld [vmem:[%s585 + $0x30] sm:$0xf]
        %v599 = vld [vmem:[%s585 + $0x34] sm:$0xf]
        %v600 = vld [vmem:[%s585 + $0x38] sm:$0xf]
        %v601 = vld [vmem:[%s585 + $0x3c] sm:$0xf]
        %v602 = vunpack.c.l.bf16 %v586
        %v603 = vunpack.c.l.bf16 %v587
        %v604 = vunpack.c.l.bf16 %v588
        %v605 = vunpack.c.l.bf16 %v589
        %v606 = vunpack.c.l.bf16 %v590
        %v607 = vunpack.c.l.bf16 %v591
        %v608 = vunpack.c.l.bf16 %v592
        %v609 = vunpack.c.l.bf16 %v593
        %v610 = vunpack.c.l.bf16 %v594
        %v611 = vunpack.c.l.bf16 %v595
        %v612 = vunpack.c.l.bf16 %v596
        %v613 = vunpack.c.l.bf16 %v597
        %v614 = vunpack.c.l.bf16 %v598
        %v615 = vunpack.c.l.bf16 %v599
        %v616 = vunpack.c.l.bf16 %v600
        %v617 = vunpack.c.l.bf16 %v601
        %s618 = scalar_lea.vmem %s374, 1
        %v619 = vld [vmem:[%s618] sm:$0x1]
        %v621 = vlaneseq
        %v622 = vshrl.u32 %v621, 7
        %v623 = vsub.s32 0, %v622
        %v624 = vrot.slane %v619, %v623
        %626 = vmatprep.subr.mxu0 0.0
        %627 = vmatpush1.msra.mxu0 %v602
        %628 = vmatprep.subr.mxu0 0.0
        %629 = vmatpush1.msra.mxu0 %v603
        %630 = vmatprep.subr.mxu0 0.0
        %631 = vmatpush1.msra.mxu0 %v604
        %632 = vmatprep.subr.mxu0 0.0
        %633 = vmatpush1.msra.mxu0 %v605
        %634 = vmatprep.subr.mxu0 0.0
        %635 = vmatpush1.msra.mxu0 %v606
        %636 = vmatprep.subr.mxu0 0.0
        %637 = vmatpush1.msra.mxu0 %v607
        %638 = vmatprep.subr.mxu0 0.0
        %639 = vmatpush1.msra.mxu0 %v608
        %640 = vmatprep.subr.mxu0 0.0
        %641 = vmatpush1.msra.mxu0 %v609
        %642 = vmatprep.subr.mxu0 0.0
        %643 = vmatpush1.msra.mxu0 %v610
        %644 = vmatprep.subr.mxu0 0.0
        %645 = vmatpush1.msra.mxu0 %v611
        %646 = vmatprep.subr.mxu0 0.0
        %647 = vmatpush1.msra.mxu0 %v612
        %648 = vmatprep.subr.mxu0 0.0
        %649 = vmatpush1.msra.mxu0 %v613
        %650 = vmatprep.subr.mxu0 0.0
        %651 = vmatpush1.msra.mxu0 %v614
        %652 = vmatprep.subr.mxu0 0.0
        %653 = vmatpush1.msra.mxu0 %v615
        %654 = vmatprep.subr.mxu0 0.0
        %655 = vmatpush1.msra.mxu0 %v616
        %656 = vmatprep.subr.mxu0 0.0
        %657 = vmatpush1.msra.mxu0 %v617
        %658 = vmatprep.subr.mxu0 0.0
        %659 = vmatpush1.msra.mxu0 0.0
        %660 = vmatprep.subr.mxu0 0.0
        %661 = vmatpush1.msra.mxu0 0.0
        %662 = vmatprep.subr.mxu0 0.0
        %663 = vmatpush1.msra.mxu0 0.0
        %664 = vmatprep.subr.mxu0 0.0
        %665 = vmatpush1.msra.mxu0 0.0
        %666 = vmatprep.subr.mxu0 0.0
        %667 = vmatpush1.msra.mxu0 0.0
        %668 = vmatprep.subr.mxu0 0.0
        %669 = vmatpush1.msra.mxu0 0.0
        %670 = vmatprep.subr.mxu0 0.0
        %671 = vmatpush1.msra.mxu0 0.0
        %672 = vmatprep.subr.mxu0 0.0
        %673 = vmatpush1.msra.mxu0 0.0
        %674 = vmatprep.subr.mxu0 0.0
        %675 = vmatpush1.msra.mxu0 0.0
        %676 = vmatprep.subr.mxu0 0.0
        %677 = vmatpush1.msra.mxu0 0.0
        %678 = vmatprep.subr.mxu0 0.0
        %679 = vmatpush1.msra.mxu0 0.0
        %680 = vmatprep.subr.mxu0 0.0
        %681 = vmatpush1.msra.mxu0 0.0
        %682 = vmatprep.subr.mxu0 0.0
        %683 = vmatpush1.msra.mxu0 0.0
        %684 = vmatprep.subr.mxu0 0.0
        %685 = vmatpush1.msra.mxu0 0.0
        %686 = vmatprep.subr.mxu0 0.0
        %687 = vmatpush1.msra.mxu0 0.0
        %688 = vmatprep.subr.mxu0 0.0
        %689 = vmatpush1.msra.mxu0 0.0
        %690 = vmatprep.mubr.f32.mxu0 0.0
        %691 = vmatmul.mubr.f32.gmra.mrb[0].mxu0 %v584
        %v692 = vpop.f32.mrb[0].mxu0
        %v693 = vadd.f32 %v624, %v692
        %v694 = vpop.f32.mrb[0].mxu0
        %695 = vdwg.mxu0
        %v696 = vmax.f32 %v693, 0.0
        %v697 = vld [vmem:[%s379] sm:$0xf]
        %v698 = vld [vmem:[%s379 + $0x4] sm:$0xf]
        %v699 = vld [vmem:[%s379 + $0x8] sm:$0xf]
        %v700 = vld [vmem:[%s379 + $0xc] sm:$0xf]
        %v701 = vld [vmem:[%s379 + $0x10] sm:$0xf]
        %v702 = vld [vmem:[%s379 + $0x14] sm:$0xf]
        %v703 = vld [vmem:[%s379 + $0x18] sm:$0xf]
        %v704 = vld [vmem:[%s379 + $0x1c] sm:$0xf]
        %v705 = vld [vmem:[%s379 + $0x20] sm:$0xf]
        %v706 = vld [vmem:[%s379 + $0x24] sm:$0xf]
        %v707 = vld [vmem:[%s379 + $0x28] sm:$0xf]
        %v708 = vld [vmem:[%s379 + $0x2c] sm:$0xf]
        %v709 = vld [vmem:[%s379 + $0x30] sm:$0xf]
        %v710 = vld [vmem:[%s379 + $0x34] sm:$0xf]
        %v711 = vld [vmem:[%s379 + $0x38] sm:$0xf]
        %v712 = vld [vmem:[%s379 + $0x3c] sm:$0xf]
        %v713 = vunpack.c.l.bf16 %v697
        %v714 = vunpack.c.l.bf16 %v698
        %v715 = vunpack.c.l.bf16 %v699
        %v716 = vunpack.c.l.bf16 %v700
        %v717 = vunpack.c.l.bf16 %v701
        %v718 = vunpack.c.l.bf16 %v702
        %v719 = vunpack.c.l.bf16 %v703
        %v720 = vunpack.c.l.bf16 %v704
        %v721 = vunpack.c.l.bf16 %v705
        %v722 = vunpack.c.l.bf16 %v706
        %v723 = vunpack.c.l.bf16 %v707
        %v724 = vunpack.c.l.bf16 %v708
        %v725 = vunpack.c.l.bf16 %v709
        %v726 = vunpack.c.l.bf16 %v710
        %v727 = vunpack.c.l.bf16 %v711
        %v728 = vunpack.c.l.bf16 %v712
        %v729 = vld [vmem:[%s383] sm:$0x1]
        %v731 = vlaneseq
        %v732 = vshrl.u32 %v731, 7
        %v733 = vsub.s32 0, %v732
        %v734 = vrot.slane %v729, %v733
        %736 = vmatprep.subr.mxu0 0.0
        %737 = vmatpush1.msra.mxu0 %v713
        %738 = vmatprep.subr.mxu0 0.0
        %739 = vmatpush1.msra.mxu0 %v714
        %740 = vmatprep.subr.mxu0 0.0
        %741 = vmatpush1.msra.mxu0 %v715
        %742 = vmatprep.subr.mxu0 0.0
        %743 = vmatpush1.msra.mxu0 %v716
        %744 = vmatprep.subr.mxu0 0.0
        %745 = vmatpush1.msra.mxu0 %v717
        %746 = vmatprep.subr.mxu0 0.0
        %747 = vmatpush1.msra.mxu0 %v718
        %748 = vmatprep.subr.mxu0 0.0
        %749 = vmatpush1.msra.mxu0 %v719
        %750 = vmatprep.subr.mxu0 0.0
        %751 = vmatpush1.msra.mxu0 %v720
        %752 = vmatprep.subr.mxu0 0.0
        %753 = vmatpush1.msra.mxu0 %v721
        %754 = vmatprep.subr.mxu0 0.0
        %755 = vmatpush1.msra.mxu0 %v722
        %756 = vmatprep.subr.mxu0 0.0
        %757 = vmatpush1.msra.mxu0 %v723
        %758 = vmatprep.subr.mxu0 0.0
        %759 = vmatpush1.msra.mxu0 %v724
        %760 = vmatprep.subr.mxu0 0.0
        %761 = vmatpush1.msra.mxu0 %v725
        %762 = vmatprep.subr.mxu0 0.0
        %763 = vmatpush1.msra.mxu0 %v726
        %764 = vmatprep.subr.mxu0 0.0
        %765 = vmatpush1.msra.mxu0 %v727
        %766 = vmatprep.subr.mxu0 0.0
        %767 = vmatpush1.msra.mxu0 %v728
        %768 = vmatprep.subr.mxu0 0.0
        %769 = vmatpush1.msra.mxu0 0.0
        %770 = vmatprep.subr.mxu0 0.0
        %771 = vmatpush1.msra.mxu0 0.0
        %772 = vmatprep.subr.mxu0 0.0
        %773 = vmatpush1.msra.mxu0 0.0
        %774 = vmatprep.subr.mxu0 0.0
        %775 = vmatpush1.msra.mxu0 0.0
        %776 = vmatprep.subr.mxu0 0.0
        %777 = vmatpush1.msra.mxu0 0.0
        %778 = vmatprep.subr.mxu0 0.0
        %779 = vmatpush1.msra.mxu0 0.0
        %780 = vmatprep.subr.mxu0 0.0
        %781 = vmatpush1.msra.mxu0 0.0
        %782 = vmatprep.subr.mxu0 0.0
        %783 = vmatpush1.msra.mxu0 0.0
        %784 = vmatprep.subr.mxu0 0.0
        %785 = vmatpush1.msra.mxu0 0.0
        %786 = vmatprep.subr.mxu0 0.0
        %787 = vmatpush1.msra.mxu0 0.0
        %788 = vmatprep.subr.mxu0 0.0
        %789 = vmatpush1.msra.mxu0 0.0
        %790 = vmatprep.subr.mxu0 0.0
        %791 = vmatpush1.msra.mxu0 0.0
        %792 = vmatprep.subr.mxu0 0.0
        %793 = vmatpush1.msra.mxu0 0.0
        %794 = vmatprep.subr.mxu0 0.0
        %795 = vmatpush1.msra.mxu0 0.0
        %796 = vmatprep.subr.mxu0 0.0
        %797 = vmatpush1.msra.mxu0 0.0
        %798 = vmatprep.subr.mxu0 0.0
        %799 = vmatpush1.msra.mxu0 0.0
        %800 = vmatprep.mubr.f32.mxu0 0.0
        %801 = vmatmul.mubr.f32.gmra.mrb[0].mxu0 %v696
        %v802 = vpop.f32.mrb[0].mxu0
        %v803 = vadd.f32 %v734, %v802
        %v804 = vpop.f32.mrb[0].mxu0
        %805 = vdwg.mxu0
        %s806 = scalar_lea.vmem %s366, 8
        %v807 = vld [vmem:[%s806] sm:$0xf]
        %v808 = vld [vmem:[%s806 + $0x4] sm:$0xf]
        %v809 = vunpack.c.l.bf16 %v807
        %v810 = vunpack.c.l.bf16 %v808
        %s811 = scalar_lea.vmem %s370, 1
        %v812 = vld [vmem:[%s811] sm:$0x1]
        %v814 = vlaneseq
        %v815 = vshrl.u32 %v814, 7
        %v816 = vsub.s32 0, %v815
        %v817 = vrot.slane %v812, %v816
        %819 = vmatprep.subr.mxu0 0.0
        %820 = vmatpush1.msra.mxu0 %v809
        %821 = vmatprep.subr.mxu0 0.0
        %822 = vmatpush1.msra.mxu0 %v810
        %823 = vmatprep.subr.mxu0 0.0
        %824 = vmatpush1.msra.mxu0 0.0
        %825 = vmatprep.subr.mxu0 0.0
        %826 = vmatpush1.msra.mxu0 0.0
        %827 = vmatprep.subr.mxu0 0.0
        %828 = vmatpush1.msra.mxu0 0.0
        %829 = vmatprep.subr.mxu0 0.0
        %830 = vmatpush1.msra.mxu0 0.0
        %831 = vmatprep.subr.mxu0 0.0
        %832 = vmatpush1.msra.mxu0 0.0
        %833 = vmatprep.subr.mxu0 0.0
        %834 = vmatpush1.msra.mxu0 0.0
        %835 = vmatprep.subr.mxu0 0.0
        %836 = vmatpush1.msra.mxu0 0.0
        %837 = vmatprep.subr.mxu0 0.0
        %838 = vmatpush1.msra.mxu0 0.0
        %839 = vmatprep.subr.mxu0 0.0
        %840 = vmatpush1.msra.mxu0 0.0
        %841 = vmatprep.subr.mxu0 0.0
        %842 = vmatpush1.msra.mxu0 0.0
        %843 = vmatprep.subr.mxu0 0.0
        %844 = vmatpush1.msra.mxu0 0.0
        %845 = vmatprep.subr.mxu0 0.0
        %846 = vmatpush1.msra.mxu0 0.0
        %847 = vmatprep.subr.mxu0 0.0
        %848 = vmatpush1.msra.mxu0 0.0
        %849 = vmatprep.subr.mxu0 0.0
        %850 = vmatpush1.msra.mxu0 0.0
        %851 = vmatprep.subr.mxu0 0.0
        %852 = vmatpush1.msra.mxu0 0.0
        %853 = vmatprep.subr.mxu0 0.0
        %854 = vmatpush1.msra.mxu0 0.0
        %855 = vmatprep.subr.mxu0 0.0
        %856 = vmatpush1.msra.mxu0 0.0
        %857 = vmatprep.subr.mxu0 0.0
        %858 = vmatpush1.msra.mxu0 0.0
        %859 = vmatprep.subr.mxu0 0.0
        %860 = vmatpush1.msra.mxu0 0.0
        %861 = vmatprep.subr.mxu0 0.0
        %862 = vmatpush1.msra.mxu0 0.0
        %863 = vmatprep.subr.mxu0 0.0
        %864 = vmatpush1.msra.mxu0 0.0
        %865 = vmatprep.subr.mxu0 0.0
        %866 = vmatpush1.msra.mxu0 0.0
        %867 = vmatprep.subr.mxu0 0.0
        %868 = vmatpush1.msra.mxu0 0.0
        %869 = vmatprep.subr.mxu0 0.0
        %870 = vmatpush1.msra.mxu0 0.0
        %871 = vmatprep.subr.mxu0 0.0
        %872 = vmatpush1.msra.mxu0 0.0
        %873 = vmatprep.subr.mxu0 0.0
        %874 = vmatpush1.msra.mxu0 0.0
        %875 = vmatprep.subr.mxu0 0.0
        %876 = vmatpush1.msra.mxu0 0.0
        %877 = vmatprep.subr.mxu0 0.0
        %878 = vmatpush1.msra.mxu0 0.0
        %879 = vmatprep.subr.mxu0 0.0
        %880 = vmatpush1.msra.mxu0 0.0
        %881 = vmatprep.subr.mxu0 0.0
        %882 = vmatpush1.msra.mxu0 0.0
        %883 = vmatprep.mubr.f32.mxu0 0.0
        %884 = vmatmul.mubr.f32.gmra.mrb[0].mxu0 %v402
        %v885 = vpop.f32.mrb[0].mxu0
        %v886 = vadd.f32 %v817, %v885
        %v887 = vpop.f32.mrb[0].mxu0
        %888 = vdwg.mxu0
        %v889 = vmax.f32 %v886, 0.0
        %s890 = scalar_lea.vmem %s310, 128 [#allocation2]
        %v891 = vld [vmem:[%s890] sm:$0xf]
        %v892 = vld [vmem:[%s890 + $0x4] sm:$0xf]
        %v893 = vld [vmem:[%s890 + $0x8] sm:$0xf]
        %v894 = vld [vmem:[%s890 + $0xc] sm:$0xf]
        %v895 = vld [vmem:[%s890 + $0x10] sm:$0xf]
        %v896 = vld [vmem:[%s890 + $0x14] sm:$0xf]
        %v897 = vld [vmem:[%s890 + $0x18] sm:$0xf]
        %v898 = vld [vmem:[%s890 + $0x1c] sm:$0xf]
        %v899 = vld [vmem:[%s890 + $0x20] sm:$0xf]
        %v900 = vld [vmem:[%s890 + $0x24] sm:$0xf]
        %v901 = vld [vmem:[%s890 + $0x28] sm:$0xf]
        %v902 = vld [vmem:[%s890 + $0x2c] sm:$0xf]
        %v903 = vld [vmem:[%s890 + $0x30] sm:$0xf]
        %v904 = vld [vmem:[%s890 + $0x34] sm:$0xf]
        %v905 = vld [vmem:[%s890 + $0x38] sm:$0xf]
        %v906 = vld [vmem:[%s890 + $0x3c] sm:$0xf]
        %v907 = vunpack.c.l.bf16 %v891
        %v908 = vunpack.c.l.bf16 %v892
        %v909 = vunpack.c.l.bf16 %v893
        %v910 = vunpack.c.l.bf16 %v894
        %v911 = vunpack.c.l.bf16 %v895
        %v912 = vunpack.c.l.bf16 %v896
        %v913 = vunpack.c.l.bf16 %v897
        %v914 = vunpack.c.l.bf16 %v898
        %v915 = vunpack.c.l.bf16 %v899
        %v916 = vunpack.c.l.bf16 %v900
        %v917 = vunpack.c.l.bf16 %v901
        %v918 = vunpack.c.l.bf16 %v902
        %v919 = vunpack.c.l.bf16 %v903
        %v920 = vunpack.c.l.bf16 %v904
        %v921 = vunpack.c.l.bf16 %v905
        %v922 = vunpack.c.l.bf16 %v906
        %s923 = scalar_lea.vmem %s374, 2
        %v924 = vld [vmem:[%s923] sm:$0x1]
        %v926 = vlaneseq
        %v927 = vshrl.u32 %v926, 7
        %v928 = vsub.s32 0, %v927
        %v929 = vrot.slane %v924, %v928
        %931 = vmatprep.subr.mxu0 0.0
        %932 = vmatpush1.msra.mxu0 %v907
        %933 = vmatprep.subr.mxu0 0.0
        %934 = vmatpush1.msra.mxu0 %v908
        %935 = vmatprep.subr.mxu0 0.0
        %936 = vmatpush1.msra.mxu0 %v909
        %937 = vmatprep.subr.mxu0 0.0
        %938 = vmatpush1.msra.mxu0 %v910
        %939 = vmatprep.subr.mxu0 0.0
        %940 = vmatpush1.msra.mxu0 %v911
        %941 = vmatprep.subr.mxu0 0.0
        %942 = vmatpush1.msra.mxu0 %v912
        %943 = vmatprep.subr.mxu0 0.0
        %944 = vmatpush1.msra.mxu0 %v913
        %945 = vmatprep.subr.mxu0 0.0
        %946 = vmatpush1.msra.mxu0 %v914
        %947 = vmatprep.subr.mxu0 0.0
        %948 = vmatpush1.msra.mxu0 %v915
        %949 = vmatprep.subr.mxu0 0.0
        %950 = vmatpush1.msra.mxu0 %v916
        %951 = vmatprep.subr.mxu0 0.0
        %952 = vmatpush1.msra.mxu0 %v917
        %953 = vmatprep.subr.mxu0 0.0
        %954 = vmatpush1.msra.mxu0 %v918
        %955 = vmatprep.subr.mxu0 0.0
        %956 = vmatpush1.msra.mxu0 %v919
        %957 = vmatprep.subr.mxu0 0.0
        %958 = vmatpush1.msra.mxu0 %v920
        %959 = vmatprep.subr.mxu0 0.0
        %960 = vmatpush1.msra.mxu0 %v921
        %961 = vmatprep.subr.mxu0 0.0
        %962 = vmatpush1.msra.mxu0 %v922
        %963 = vmatprep.subr.mxu0 0.0
        %964 = vmatpush1.msra.mxu0 0.0
        %965 = vmatprep.subr.mxu0 0.0
        %966 = vmatpush1.msra.mxu0 0.0
        %967 = vmatprep.subr.mxu0 0.0
        %968 = vmatpush1.msra.mxu0 0.0
        %969 = vmatprep.subr.mxu0 0.0
        %970 = vmatpush1.msra.mxu0 0.0
        %971 = vmatprep.subr.mxu0 0.0
        %972 = vmatpush1.msra.mxu0 0.0
        %973 = vmatprep.subr.mxu0 0.0
        %974 = vmatpush1.msra.mxu0 0.0
        %975 = vmatprep.subr.mxu0 0.0
        %976 = vmatpush1.msra.mxu0 0.0
        %977 = vmatprep.subr.mxu0 0.0
        %978 = vmatpush1.msra.mxu0 0.0
        %979 = vmatprep.subr.mxu0 0.0
        %980 = vmatpush1.msra.mxu0 0.0
        %981 = vmatprep.subr.mxu0 0.0
        %982 = vmatpush1.msra.mxu0 0.0
        %983 = vmatprep.subr.mxu0 0.0
        %984 = vmatpush1.msra.mxu0 0.0
        %985 = vmatprep.subr.mxu0 0.0
        %986 = vmatpush1.msra.mxu0 0.0
        %987 = vmatprep.subr.mxu0 0.0
        %988 = vmatpush1.msra.mxu0 0.0
        %989 = vmatprep.subr.mxu0 0.0
        %990 = vmatpush1.msra.mxu0 0.0
        %991 = vmatprep.subr.mxu0 0.0
        %992 = vmatpush1.msra.mxu0 0.0
        %993 = vmatprep.subr.mxu0 0.0
        %994 = vmatpush1.msra.mxu0 0.0
        %995 = vmatprep.mubr.f32.mxu0 0.0
        %996 = vmatmul.mubr.f32.gmra.mrb[0].mxu0 %v889
        %v997 = vpop.f32.mrb[0].mxu0
        %v998 = vadd.f32 %v929, %v997
        %v999 = vpop.f32.mrb[0].mxu0
        %1000 = vdwg.mxu0
        %v1001 = vmax.f32 %v998, 0.0
        %s1002 = scalar_lea.vmem %s310, 192 [#allocation2]
        %v1003 = vld [vmem:[%s1002] sm:$0xf]
        %v1004 = vld [vmem:[%s1002 + $0x4] sm:$0xf]
        %v1005 = vld [vmem:[%s1002 + $0x8] sm:$0xf]
        %v1006 = vld [vmem:[%s1002 + $0xc] sm:$0xf]
        %v1007 = vld [vmem:[%s1002 + $0x10] sm:$0xf]
        %v1008 = vld [vmem:[%s1002 + $0x14] sm:$0xf]
        %v1009 = vld [vmem:[%s1002 + $0x18] sm:$0xf]
        %v1010 = vld [vmem:[%s1002 + $0x1c] sm:$0xf]
        %v1011 = vld [vmem:[%s1002 + $0x20] sm:$0xf]
        %v1012 = vld [vmem:[%s1002 + $0x24] sm:$0xf]
        %v1013 = vld [vmem:[%s1002 + $0x28] sm:$0xf]
        %v1014 = vld [vmem:[%s1002 + $0x2c] sm:$0xf]
        %v1015 = vld [vmem:[%s1002 + $0x30] sm:$0xf]
        %v1016 = vld [vmem:[%s1002 + $0x34] sm:$0xf]
        %v1017 = vld [vmem:[%s1002 + $0x38] sm:$0xf]
        %v1018 = vld [vmem:[%s1002 + $0x3c] sm:$0xf]
        %v1019 = vunpack.c.l.bf16 %v1003
        %v1020 = vunpack.c.l.bf16 %v1004
        %v1021 = vunpack.c.l.bf16 %v1005
        %v1022 = vunpack.c.l.bf16 %v1006
        %v1023 = vunpack.c.l.bf16 %v1007
        %v1024 = vunpack.c.l.bf16 %v1008
        %v1025 = vunpack.c.l.bf16 %v1009
        %v1026 = vunpack.c.l.bf16 %v1010
        %v1027 = vunpack.c.l.bf16 %v1011
        %v1028 = vunpack.c.l.bf16 %v1012
        %v1029 = vunpack.c.l.bf16 %v1013
        %v1030 = vunpack.c.l.bf16 %v1014
        %v1031 = vunpack.c.l.bf16 %v1015
        %v1032 = vunpack.c.l.bf16 %v1016
        %v1033 = vunpack.c.l.bf16 %v1017
        %v1034 = vunpack.c.l.bf16 %v1018
        %s1035 = scalar_lea.vmem %s374, 3
        %v1036 = vld [vmem:[%s1035] sm:$0x1]
        %v1038 = vlaneseq
        %v1039 = vshrl.u32 %v1038, 7
        %v1040 = vsub.s32 0, %v1039
        %v1041 = vrot.slane %v1036, %v1040
        %1043 = vmatprep.subr.mxu0 0.0
        %1044 = vmatpush1.msra.mxu0 %v1019
        %1045 = vmatprep.subr.mxu0 0.0
        %1046 = vmatpush1.msra.mxu0 %v1020
        %1047 = vmatprep.subr.mxu0 0.0
        %1048 = vmatpush1.msra.mxu0 %v1021
        %1049 = vmatprep.subr.mxu0 0.0
        %1050 = vmatpush1.msra.mxu0 %v1022
        %1051 = vmatprep.subr.mxu0 0.0
        %1052 = vmatpush1.msra.mxu0 %v1023
        %1053 = vmatprep.subr.mxu0 0.0
        %1054 = vmatpush1.msra.mxu0 %v1024
        %1055 = vmatprep.subr.mxu0 0.0
        %1056 = vmatpush1.msra.mxu0 %v1025
        %1057 = vmatprep.subr.mxu0 0.0
        %1058 = vmatpush1.msra.mxu0 %v1026
        %1059 = vmatprep.subr.mxu0 0.0
        %1060 = vmatpush1.msra.mxu0 %v1027
        %1061 = vmatprep.subr.mxu0 0.0
        %1062 = vmatpush1.msra.mxu0 %v1028
        %1063 = vmatprep.subr.mxu0 0.0
        %1064 = vmatpush1.msra.mxu0 %v1029
        %1065 = vmatprep.subr.mxu0 0.0
        %1066 = vmatpush1.msra.mxu0 %v1030
        %1067 = vmatprep.subr.mxu0 0.0
        %1068 = vmatpush1.msra.mxu0 %v1031
        %1069 = vmatprep.subr.mxu0 0.0
        %1070 = vmatpush1.msra.mxu0 %v1032
        %1071 = vmatprep.subr.mxu0 0.0
        %1072 = vmatpush1.msra.mxu0 %v1033
        %1073 = vmatprep.subr.mxu0 0.0
        %1074 = vmatpush1.msra.mxu0 %v1034
        %1075 = vmatprep.subr.mxu0 0.0
        %1076 = vmatpush1.msra.mxu0 0.0
        %1077 = vmatprep.subr.mxu0 0.0
        %1078 = vmatpush1.msra.mxu0 0.0
        %1079 = vmatprep.subr.mxu0 0.0
        %1080 = vmatpush1.msra.mxu0 0.0
        %1081 = vmatprep.subr.mxu0 0.0
        %1082 = vmatpush1.msra.mxu0 0.0
        %1083 = vmatprep.subr.mxu0 0.0
        %1084 = vmatpush1.msra.mxu0 0.0
        %1085 = vmatprep.subr.mxu0 0.0
        %1086 = vmatpush1.msra.mxu0 0.0
        %1087 = vmatprep.subr.mxu0 0.0
        %1088 = vmatpush1.msra.mxu0 0.0
        %1089 = vmatprep.subr.mxu0 0.0
        %1090 = vmatpush1.msra.mxu0 0.0
        %1091 = vmatprep.subr.mxu0 0.0
        %1092 = vmatpush1.msra.mxu0 0.0
        %1093 = vmatprep.subr.mxu0 0.0
        %1094 = vmatpush1.msra.mxu0 0.0
        %1095 = vmatprep.subr.mxu0 0.0
        %1096 = vmatpush1.msra.mxu0 0.0
        %1097 = vmatprep.subr.mxu0 0.0
        %1098 = vmatpush1.msra.mxu0 0.0
        %1099 = vmatprep.subr.mxu0 0.0
        %1100 = vmatpush1.msra.mxu0 0.0
        %1101 = vmatprep.subr.mxu0 0.0
        %1102 = vmatpush1.msra.mxu0 0.0
        %1103 = vmatprep.subr.mxu0 0.0
        %1104 = vmatpush1.msra.mxu0 0.0
        %1105 = vmatprep.subr.mxu0 0.0
        %1106 = vmatpush1.msra.mxu0 0.0
        %1107 = vmatprep.mubr.f32.mxu0 0.0
        %1108 = vmatmul.mubr.f32.gmra.mrb[0].mxu0 %v1001
        %v1109 = vpop.f32.mrb[0].mxu0
        %v1110 = vadd.f32 %v1041, %v1109
        %v1111 = vpop.f32.mrb[0].mxu0
        %1112 = vdwg.mxu0
        %v1113 = vmax.f32 %v1110, 0.0
        %s1114 = scalar_lea.vmem %s379, 64
        %v1115 = vld [vmem:[%s1114] sm:$0xf]
        %v1116 = vld [vmem:[%s1114 + $0x4] sm:$0xf]
        %v1117 = vld [vmem:[%s1114 + $0x8] sm:$0xf]
        %v1118 = vld [vmem:[%s1114 + $0xc] sm:$0xf]
        %v1119 = vld [vmem:[%s1114 + $0x10] sm:$0xf]
        %v1120 = vld [vmem:[%s1114 + $0x14] sm:$0xf]
        %v1121 = vld [vmem:[%s1114 + $0x18] sm:$0xf]
        %v1122 = vld [vmem:[%s1114 + $0x1c] sm:$0xf]
        %v1123 = vld [vmem:[%s1114 + $0x20] sm:$0xf]
        %v1124 = vld [vmem:[%s1114 + $0x24] sm:$0xf]
        %v1125 = vld [vmem:[%s1114 + $0x28] sm:$0xf]
        %v1126 = vld [vmem:[%s1114 + $0x2c] sm:$0xf]
        %v1127 = vld [vmem:[%s1114 + $0x30] sm:$0xf]
        %v1128 = vld [vmem:[%s1114 + $0x34] sm:$0xf]
        %v1129 = vld [vmem:[%s1114 + $0x38] sm:$0xf]
        %v1130 = vld [vmem:[%s1114 + $0x3c] sm:$0xf]
        %v1131 = vunpack.c.l.bf16 %v1115
        %v1132 = vunpack.c.l.bf16 %v1116
        %v1133 = vunpack.c.l.bf16 %v1117
        %v1134 = vunpack.c.l.bf16 %v1118
        %v1135 = vunpack.c.l.bf16 %v1119
        %v1136 = vunpack.c.l.bf16 %v1120
        %v1137 = vunpack.c.l.bf16 %v1121
        %v1138 = vunpack.c.l.bf16 %v1122
        %v1139 = vunpack.c.l.bf16 %v1123
        %v1140 = vunpack.c.l.bf16 %v1124
        %v1141 = vunpack.c.l.bf16 %v1125
        %v1142 = vunpack.c.l.bf16 %v1126
        %v1143 = vunpack.c.l.bf16 %v1127
        %v1144 = vunpack.c.l.bf16 %v1128
        %v1145 = vunpack.c.l.bf16 %v1129
        %v1146 = vunpack.c.l.bf16 %v1130
        %s1147 = scalar_lea.vmem %s383, 1
        %v1148 = vld [vmem:[%s1147] sm:$0x1]
        %v1150 = vlaneseq
        %v1151 = vshrl.u32 %v1150, 7
        %v1152 = vsub.s32 0, %v1151
        %v1153 = vrot.slane %v1148, %v1152
        %1155 = vmatprep.subr.mxu0 0.0
        %1156 = vmatpush1.msra.mxu0 %v1131
        %1157 = vmatprep.subr.mxu0 0.0
        %1158 = vmatpush1.msra.mxu0 %v1132
        %1159 = vmatprep.subr.mxu0 0.0
        %1160 = vmatpush1.msra.mxu0 %v1133
        %1161 = vmatprep.subr.mxu0 0.0
        %1162 = vmatpush1.msra.mxu0 %v1134
        %1163 = vmatprep.subr.mxu0 0.0
        %1164 = vmatpush1.msra.mxu0 %v1135
        %1165 = vmatprep.subr.mxu0 0.0
        %1166 = vmatpush1.msra.mxu0 %v1136
        %1167 = vmatprep.subr.mxu0 0.0
        %1168 = vmatpush1.msra.mxu0 %v1137
        %1169 = vmatprep.subr.mxu0 0.0
        %1170 = vmatpush1.msra.mxu0 %v1138
        %1171 = vmatprep.subr.mxu0 0.0
        %1172 = vmatpush1.msra.mxu0 %v1139
        %1173 = vmatprep.subr.mxu0 0.0
        %1174 = vmatpush1.msra.mxu0 %v1140
        %1175 = vmatprep.subr.mxu0 0.0
        %1176 = vmatpush1.msra.mxu0 %v1141
        %1177 = vmatprep.subr.mxu0 0.0
        %1178 = vmatpush1.msra.mxu0 %v1142
        %1179 = vmatprep.subr.mxu0 0.0
        %1180 = vmatpush1.msra.mxu0 %v1143
        %1181 = vmatprep.subr.mxu0 0.0
        %1182 = vmatpush1.msra.mxu0 %v1144
        %1183 = vmatprep.subr.mxu0 0.0
        %1184 = vmatpush1.msra.mxu0 %v1145
        %1185 = vmatprep.subr.mxu0 0.0
        %1186 = vmatpush1.msra.mxu0 %v1146
        %1187 = vmatprep.subr.mxu0 0.0
        %1188 = vmatpush1.msra.mxu0 0.0
        %1189 = vmatprep.subr.mxu0 0.0
        %1190 = vmatpush1.msra.mxu0 0.0
        %1191 = vmatprep.subr.mxu0 0.0
        %1192 = vmatpush1.msra.mxu0 0.0
        %1193 = vmatprep.subr.mxu0 0.0
        %1194 = vmatpush1.msra.mxu0 0.0
        %1195 = vmatprep.subr.mxu0 0.0
        %1196 = vmatpush1.msra.mxu0 0.0
        %1197 = vmatprep.subr.mxu0 0.0
        %1198 = vmatpush1.msra.mxu0 0.0
        %1199 = vmatprep.subr.mxu0 0.0
        %1200 = vmatpush1.msra.mxu0 0.0
        %1201 = vmatprep.subr.mxu0 0.0
        %1202 = vmatpush1.msra.mxu0 0.0
        %1203 = vmatprep.subr.mxu0 0.0
        %1204 = vmatpush1.msra.mxu0 0.0
        %1205 = vmatprep.subr.mxu0 0.0
        %1206 = vmatpush1.msra.mxu0 0.0
        %1207 = vmatprep.subr.mxu0 0.0
        %1208 = vmatpush1.msra.mxu0 0.0
        %1209 = vmatprep.subr.mxu0 0.0
        %1210 = vmatpush1.msra.mxu0 0.0
        %1211 = vmatprep.subr.mxu0 0.0
        %1212 = vmatpush1.msra.mxu0 0.0
        %1213 = vmatprep.subr.mxu0 0.0
        %1214 = vmatpush1.msra.mxu0 0.0
        %1215 = vmatprep.subr.mxu0 0.0
        %1216 = vmatpush1.msra.mxu0 0.0
        %1217 = vmatprep.subr.mxu0 0.0
        %1218 = vmatpush1.msra.mxu0 0.0
        %1219 = vmatprep.mubr.f32.mxu0 0.0
        %1220 = vmatmul.mubr.f32.gmra.mrb[0].mxu0 %v1113
        %v1221 = vpop.f32.mrb[0].mxu0
        %v1222 = vadd.f32 %v1153, %v1221
        %v1223 = vpop.f32.mrb[0].mxu0
        %1224 = vdwg.mxu0
        %s1225 = scalar_lea.vmem %s366, 16
        %v1226 = vld [vmem:[%s1225] sm:$0xf]
        %v1227 = vld [vmem:[%s1225 + $0x4] sm:$0xf]
        %v1228 = vunpack.c.l.bf16 %v1226
        %v1229 = vunpack.c.l.bf16 %v1227
        %s1230 = scalar_lea.vmem %s370, 2
        %v1231 = vld [vmem:[%s1230] sm:$0x1]
        %v1233 = vlaneseq
        %v1234 = vshrl.u32 %v1233, 7
        %v1235 = vsub.s32 0, %v1234
        %v1236 = vrot.slane %v1231, %v1235
        %1238 = vmatprep.subr.mxu0 0.0
        %1239 = vmatpush1.msra.mxu0 %v1228
        %1240 = vmatprep.subr.mxu0 0.0
        %1241 = vmatpush1.msra.mxu0 %v1229
        %1242 = vmatprep.subr.mxu0 0.0
        %1243 = vmatpush1.msra.mxu0 0.0
        %1244 = vmatprep.subr.mxu0 0.0
        %1245 = vmatpush1.msra.mxu0 0.0
        %1246 = vmatprep.subr.mxu0 0.0
        %1247 = vmatpush1.msra.mxu0 0.0
        %1248 = vmatprep.subr.mxu0 0.0
        %1249 = vmatpush1.msra.mxu0 0.0
        %1250 = vmatprep.subr.mxu0 0.0
        %1251 = vmatpush1.msra.mxu0 0.0
        %1252 = vmatprep.subr.mxu0 0.0
        %1253 = vmatpush1.msra.mxu0 0.0
        %1254 = vmatprep.subr.mxu0 0.0
        %1255 = vmatpush1.msra.mxu0 0.0
        %1256 = vmatprep.subr.mxu0 0.0
        %1257 = vmatpush1.msra.mxu0 0.0
        %1258 = vmatprep.subr.mxu0 0.0
        %1259 = vmatpush1.msra.mxu0 0.0
        %1260 = vmatprep.subr.mxu0 0.0
        %1261 = vmatpush1.msra.mxu0 0.0
        %1262 = vmatprep.subr.mxu0 0.0
        %1263 = vmatpush1.msra.mxu0 0.0
        %1264 = vmatprep.subr.mxu0 0.0
        %1265 = vmatpush1.msra.mxu0 0.0
        %1266 = vmatprep.subr.mxu0 0.0
        %1267 = vmatpush1.msra.mxu0 0.0
        %1268 = vmatprep.subr.mxu0 0.0
        %1269 = vmatpush1.msra.mxu0 0.0
        %1270 = vmatprep.subr.mxu0 0.0
        %1271 = vmatpush1.msra.mxu0 0.0
        %1272 = vmatprep.subr.mxu0 0.0
        %1273 = vmatpush1.msra.mxu0 0.0
        %1274 = vmatprep.subr.mxu0 0.0
        %1275 = vmatpush1.msra.mxu0 0.0
        %1276 = vmatprep.subr.mxu0 0.0
        %1277 = vmatpush1.msra.mxu0 0.0
        %1278 = vmatprep.subr.mxu0 0.0
        %1279 = vmatpush1.msra.mxu0 0.0
        %1280 = vmatprep.subr.mxu0 0.0
        %1281 = vmatpush1.msra.mxu0 0.0
        %1282 = vmatprep.subr.mxu0 0.0
        %1283 = vmatpush1.msra.mxu0 0.0
        %1284 = vmatprep.subr.mxu0 0.0
        %1285 = vmatpush1.msra.mxu0 0.0
        %1286 = vmatprep.subr.mxu0 0.0
        %1287 = vmatpush1.msra.mxu0 0.0
        %1288 = vmatprep.subr.mxu0 0.0
        %1289 = vmatpush1.msra.mxu0 0.0
        %1290 = vmatprep.subr.mxu0 0.0
        %1291 = vmatpush1.msra.mxu0 0.0
        %1292 = vmatprep.subr.mxu0 0.0
        %1293 = vmatpush1.msra.mxu0 0.0
        %1294 = vmatprep.subr.mxu0 0.0
        %1295 = vmatpush1.msra.mxu0 0.0
        %1296 = vmatprep.subr.mxu0 0.0
        %1297 = vmatpush1.msra.mxu0 0.0
        %1298 = vmatprep.subr.mxu0 0.0
        %1299 = vmatpush1.msra.mxu0 0.0
        %1300 = vmatprep.subr.mxu0 0.0
        %1301 = vmatpush1.msra.mxu0 0.0
        %1302 = vmatprep.mubr.f32.mxu0 0.0
        %1303 = vmatmul.mubr.f32.gmra.mrb[0].mxu0 %v402
        %v1304 = vpop.f32.mrb[0].mxu0
        %v1305 = vadd.f32 %v1236, %v1304
        %v1306 = vpop.f32.mrb[0].mxu0
        %1307 = vdwg.mxu0
        %v1308 = vmax.f32 %v1305, 0.0
        %s1309 = scalar_lea.vmem %s310, 256 [#allocation2]
        %v1310 = vld [vmem:[%s1309] sm:$0xf]
        %v1311 = vld [vmem:[%s1309 + $0x4] sm:$0xf]
        %v1312 = vld [vmem:[%s1309 + $0x8] sm:$0xf]
        %v1313 = vld [vmem:[%s1309 + $0xc] sm:$0xf]
        %v1314 = vld [vmem:[%s1309 + $0x10] sm:$0xf]
        %v1315 = vld [vmem:[%s1309 + $0x14] sm:$0xf]
        %v1316 = vld [vmem:[%s1309 + $0x18] sm:$0xf]
        %v1317 = vld [vmem:[%s1309 + $0x1c] sm:$0xf]
        %v1318 = vld [vmem:[%s1309 + $0x20] sm:$0xf]
        %v1319 = vld [vmem:[%s1309 + $0x24] sm:$0xf]
        %v1320 = vld [vmem:[%s1309 + $0x28] sm:$0xf]
        %v1321 = vld [vmem:[%s1309 + $0x2c] sm:$0xf]
        %v1322 = vld [vmem:[%s1309 + $0x30] sm:$0xf]
        %v1323 = vld [vmem:[%s1309 + $0x34] sm:$0xf]
        %v1324 = vld [vmem:[%s1309 + $0x38] sm:$0xf]
        %v1325 = vld [vmem:[%s1309 + $0x3c] sm:$0xf]
        %v1326 = vunpack.c.l.bf16 %v1310
        %v1327 = vunpack.c.l.bf16 %v1311
        %v1328 = vunpack.c.l.bf16 %v1312
        %v1329 = vunpack.c.l.bf16 %v1313
        %v1330 = vunpack.c.l.bf16 %v1314
        %v1331 = vunpack.c.l.bf16 %v1315
        %v1332 = vunpack.c.l.bf16 %v1316
        %v1333 = vunpack.c.l.bf16 %v1317
        %v1334 = vunpack.c.l.bf16 %v1318
        %v1335 = vunpack.c.l.bf16 %v1319
        %v1336 = vunpack.c.l.bf16 %v1320
        %v1337 = vunpack.c.l.bf16 %v1321
        %v1338 = vunpack.c.l.bf16 %v1322
        %v1339 = vunpack.c.l.bf16 %v1323
        %v1340 = vunpack.c.l.bf16 %v1324
        %v1341 = vunpack.c.l.bf16 %v1325
        %s1342 = scalar_lea.vmem %s374, 4
        %v1343 = vld [vmem:[%s1342] sm:$0x1]
        %v1345 = vlaneseq
        %v1346 = vshrl.u32 %v1345, 7
        %v1347 = vsub.s32 0, %v1346
        %v1348 = vrot.slane %v1343, %v1347
        %1350 = vmatprep.subr.mxu0 0.0
        %1351 = vmatpush1.msra.mxu0 %v1326
        %1352 = vmatprep.subr.mxu0 0.0
        %1353 = vmatpush1.msra.mxu0 %v1327
        %1354 = vmatprep.subr.mxu0 0.0
        %1355 = vmatpush1.msra.mxu0 %v1328
        %1356 = vmatprep.subr.mxu0 0.0
        %1357 = vmatpush1.msra.mxu0 %v1329
        %1358 = vmatprep.subr.mxu0 0.0
        %1359 = vmatpush1.msra.mxu0 %v1330
        %1360 = vmatprep.subr.mxu0 0.0
        %1361 = vmatpush1.msra.mxu0 %v1331
        %1362 = vmatprep.subr.mxu0 0.0
        %1363 = vmatpush1.msra.mxu0 %v1332
        %1364 = vmatprep.subr.mxu0 0.0
        %1365 = vmatpush1.msra.mxu0 %v1333
        %1366 = vmatprep.subr.mxu0 0.0
        %1367 = vmatpush1.msra.mxu0 %v1334
        %1368 = vmatprep.subr.mxu0 0.0
        %1369 = vmatpush1.msra.mxu0 %v1335
        %1370 = vmatprep.subr.mxu0 0.0
        %1371 = vmatpush1.msra.mxu0 %v1336
        %1372 = vmatprep.subr.mxu0 0.0
        %1373 = vmatpush1.msra.mxu0 %v1337
        %1374 = vmatprep.subr.mxu0 0.0
        %1375 = vmatpush1.msra.mxu0 %v1338
        %1376 = vmatprep.subr.mxu0 0.0
        %1377 = vmatpush1.msra.mxu0 %v1339
        %1378 = vmatprep.subr.mxu0 0.0
        %1379 = vmatpush1.msra.mxu0 %v1340
        %1380 = vmatprep.subr.mxu0 0.0
        %1381 = vmatpush1.msra.mxu0 %v1341
        %1382 = vmatprep.subr.mxu0 0.0
        %1383 = vmatpush1.msra.mxu0 0.0
        %1384 = vmatprep.subr.mxu0 0.0
        %1385 = vmatpush1.msra.mxu0 0.0
        %1386 = vmatprep.subr.mxu0 0.0
        %1387 = vmatpush1.msra.mxu0 0.0
        %1388 = vmatprep.subr.mxu0 0.0
        %1389 = vmatpush1.msra.mxu0 0.0
        %1390 = vmatprep.subr.mxu0 0.0
        %1391 = vmatpush1.msra.mxu0 0.0
        %1392 = vmatprep.subr.mxu0 0.0
        %1393 = vmatpush1.msra.mxu0 0.0
        %1394 = vmatprep.subr.mxu0 0.0
        %1395 = vmatpush1.msra.mxu0 0.0
        %1396 = vmatprep.subr.mxu0 0.0
        %1397 = vmatpush1.msra.mxu0 0.0
        %1398 = vmatprep.subr.mxu0 0.0
        %1399 = vmatpush1.msra.mxu0 0.0
        %1400 = vmatprep.subr.mxu0 0.0
        %1401 = vmatpush1.msra.mxu0 0.0
        %1402 = vmatprep.subr.mxu0 0.0
        %1403 = vmatpush1.msra.mxu0 0.0
        %1404 = vmatprep.subr.mxu0 0.0
        %1405 = vmatpush1.msra.mxu0 0.0
        %1406 = vmatprep.subr.mxu0 0.0
        %1407 = vmatpush1.msra.mxu0 0.0
        %1408 = vmatprep.subr.mxu0 0.0
        %1409 = vmatpush1.msra.mxu0 0.0
        %1410 = vmatprep.subr.mxu0 0.0
        %1411 = vmatpush1.msra.mxu0 0.0
        %1412 = vmatprep.subr.mxu0 0.0
        %1413 = vmatpush1.msra.mxu0 0.0
        %1414 = vmatprep.mubr.f32.mxu0 0.0
        %1415 = vmatmul.mubr.f32.gmra.mrb[0].mxu0 %v1308
        %v1416 = vpop.f32.mrb[0].mxu0
        %v1417 = vadd.f32 %v1348, %v1416
        %v1418 = vpop.f32.mrb[0].mxu0
        %1419 = vdwg.mxu0
        %v1420 = vmax.f32 %v1417, 0.0
        %s1421 = scalar_lea.vmem %s310, 320 [#allocation2]
        %v1422 = vld [vmem:[%s1421] sm:$0xf]
        %v1423 = vld [vmem:[%s1421 + $0x4] sm:$0xf]
        %v1424 = vld [vmem:[%s1421 + $0x8] sm:$0xf]
        %v1425 = vld [vmem:[%s1421 + $0xc] sm:$0xf]
        %v1426 = vld [vmem:[%s1421 + $0x10] sm:$0xf]
        %v1427 = vld [vmem:[%s1421 + $0x14] sm:$0xf]
        %v1428 = vld [vmem:[%s1421 + $0x18] sm:$0xf]
        %v1429 = vld [vmem:[%s1421 + $0x1c] sm:$0xf]
        %v1430 = vld [vmem:[%s1421 + $0x20] sm:$0xf]
        %v1431 = vld [vmem:[%s1421 + $0x24] sm:$0xf]
        %v1432 = vld [vmem:[%s1421 + $0x28] sm:$0xf]
        %v1433 = vld [vmem:[%s1421 + $0x2c] sm:$0xf]
        %v1434 = vld [vmem:[%s1421 + $0x30] sm:$0xf]
        %v1435 = vld [vmem:[%s1421 + $0x34] sm:$0xf]
        %v1436 = vld [vmem:[%s1421 + $0x38] sm:$0xf]
        %v1437 = vld [vmem:[%s1421 + $0x3c] sm:$0xf]
        %v1438 = vunpack.c.l.bf16 %v1422
        %v1439 = vunpack.c.l.bf16 %v1423
        %v1440 = vunpack.c.l.bf16 %v1424
        %v1441 = vunpack.c.l.bf16 %v1425
        %v1442 = vunpack.c.l.bf16 %v1426
        %v1443 = vunpack.c.l.bf16 %v1427
        %v1444 = vunpack.c.l.bf16 %v1428
        %v1445 = vunpack.c.l.bf16 %v1429
        %v1446 = vunpack.c.l.bf16 %v1430
        %v1447 = vunpack.c.l.bf16 %v1431
        %v1448 = vunpack.c.l.bf16 %v1432
        %v1449 = vunpack.c.l.bf16 %v1433
        %v1450 = vunpack.c.l.bf16 %v1434
        %v1451 = vunpack.c.l.bf16 %v1435
        %v1452 = vunpack.c.l.bf16 %v1436
        %v1453 = vunpack.c.l.bf16 %v1437
        %s1454 = scalar_lea.vmem %s374, 5
        %v1455 = vld [vmem:[%s1454] sm:$0x1]
        %v1457 = vlaneseq
        %v1458 = vshrl.u32 %v1457, 7
        %v1459 = vsub.s32 0, %v1458
        %v1460 = vrot.slane %v1455, %v1459
        %1462 = vmatprep.subr.mxu0 0.0
        %1463 = vmatpush1.msra.mxu0 %v1438
        %1464 = vmatprep.subr.mxu0 0.0
        %1465 = vmatpush1.msra.mxu0 %v1439
        %1466 = vmatprep.subr.mxu0 0.0
        %1467 = vmatpush1.msra.mxu0 %v1440
        %1468 = vmatprep.subr.mxu0 0.0
        %1469 = vmatpush1.msra.mxu0 %v1441
        %1470 = vmatprep.subr.mxu0 0.0
        %1471 = vmatpush1.msra.mxu0 %v1442
        %1472 = vmatprep.subr.mxu0 0.0
        %1473 = vmatpush1.msra.mxu0 %v1443
        %1474 = vmatprep.subr.mxu0 0.0
        %1475 = vmatpush1.msra.mxu0 %v1444
        %1476 = vmatprep.subr.mxu0 0.0
        %1477 = vmatpush1.msra.mxu0 %v1445
        %1478 = vmatprep.subr.mxu0 0.0
        %1479 = vmatpush1.msra.mxu0 %v1446
        %1480 = vmatprep.subr.mxu0 0.0
        %1481 = vmatpush1.msra.mxu0 %v1447
        %1482 = vmatprep.subr.mxu0 0.0
        %1483 = vmatpush1.msra.mxu0 %v1448
        %1484 = vmatprep.subr.mxu0 0.0
        %1485 = vmatpush1.msra.mxu0 %v1449
        %1486 = vmatprep.subr.mxu0 0.0
        %1487 = vmatpush1.msra.mxu0 %v1450
        %1488 = vmatprep.subr.mxu0 0.0
        %1489 = vmatpush1.msra.mxu0 %v1451
        %1490 = vmatprep.subr.mxu0 0.0
        %1491 = vmatpush1.msra.mxu0 %v1452
        %1492 = vmatprep.subr.mxu0 0.0
        %1493 = vmatpush1.msra.mxu0 %v1453
        %1494 = vmatprep.subr.mxu0 0.0
        %1495 = vmatpush1.msra.mxu0 0.0
        %1496 = vmatprep.subr.mxu0 0.0
        %1497 = vmatpush1.msra.mxu0 0.0
        %1498 = vmatprep.subr.mxu0 0.0
        %1499 = vmatpush1.msra.mxu0 0.0
        %1500 = vmatprep.subr.mxu0 0.0
        %1501 = vmatpush1.msra.mxu0 0.0
        %1502 = vmatprep.subr.mxu0 0.0
        %1503 = vmatpush1.msra.mxu0 0.0
        %1504 = vmatprep.subr.mxu0 0.0
        %1505 = vmatpush1.msra.mxu0 0.0
        %1506 = vmatprep.subr.mxu0 0.0
        %1507 = vmatpush1.msra.mxu0 0.0
        %1508 = vmatprep.subr.mxu0 0.0
        %1509 = vmatpush1.msra.mxu0 0.0
        %1510 = vmatprep.subr.mxu0 0.0
        %1511 = vmatpush1.msra.mxu0 0.0
        %1512 = vmatprep.subr.mxu0 0.0
        %1513 = vmatpush1.msra.mxu0 0.0
        %1514 = vmatprep.subr.mxu0 0.0
        %1515 = vmatpush1.msra.mxu0 0.0
        %1516 = vmatprep.subr.mxu0 0.0
        %1517 = vmatpush1.msra.mxu0 0.0
        %1518 = vmatprep.subr.mxu0 0.0
        %1519 = vmatpush1.msra.mxu0 0.0
        %1520 = vmatprep.subr.mxu0 0.0
        %1521 = vmatpush1.msra.mxu0 0.0
        %1522 = vmatprep.subr.mxu0 0.0
        %1523 = vmatpush1.msra.mxu0 0.0
        %1524 = vmatprep.subr.mxu0 0.0
        %1525 = vmatpush1.msra.mxu0 0.0
        %1526 = vmatprep.mubr.f32.mxu0 0.0
        %1527 = vmatmul.mubr.f32.gmra.mrb[0].mxu0 %v1420
        %v1528 = vpop.f32.mrb[0].mxu0
        %v1529 = vadd.f32 %v1460, %v1528
        %v1530 = vpop.f32.mrb[0].mxu0
        %1531 = vdwg.mxu0
        %v1532 = vmax.f32 %v1529, 0.0
        %s1533 = scalar_lea.vmem %s379, 128
        %v1534 = vld [vmem:[%s1533] sm:$0xf]
        %v1535 = vld [vmem:[%s1533 + $0x4] sm:$0xf]
        %v1536 = vld [vmem:[%s1533 + $0x8] sm:$0xf]
        %v1537 = vld [vmem:[%s1533 + $0xc] sm:$0xf]
        %v1538 = vld [vmem:[%s1533 + $0x10] sm:$0xf]
        %v1539 = vld [vmem:[%s1533 + $0x14] sm:$0xf]
        %v1540 = vld [vmem:[%s1533 + $0x18] sm:$0xf]
        %v1541 = vld [vmem:[%s1533 + $0x1c] sm:$0xf]
        %v1542 = vld [vmem:[%s1533 + $0x20] sm:$0xf]
        %v1543 = vld [vmem:[%s1533 + $0x24] sm:$0xf]
        %v1544 = vld [vmem:[%s1533 + $0x28] sm:$0xf]
        %v1545 = vld [vmem:[%s1533 + $0x2c] sm:$0xf]
        %v1546 = vld [vmem:[%s1533 + $0x30] sm:$0xf]
        %v1547 = vld [vmem:[%s1533 + $0x34] sm:$0xf]
        %v1548 = vld [vmem:[%s1533 + $0x38] sm:$0xf]
        %v1549 = vld [vmem:[%s1533 + $0x3c] sm:$0xf]
        %v1550 = vunpack.c.l.bf16 %v1534
        %v1551 = vunpack.c.l.bf16 %v1535
        %v1552 = vunpack.c.l.bf16 %v1536
        %v1553 = vunpack.c.l.bf16 %v1537
        %v1554 = vunpack.c.l.bf16 %v1538
        %v1555 = vunpack.c.l.bf16 %v1539
        %v1556 = vunpack.c.l.bf16 %v1540
        %v1557 = vunpack.c.l.bf16 %v1541
        %v1558 = vunpack.c.l.bf16 %v1542
        %v1559 = vunpack.c.l.bf16 %v1543
        %v1560 = vunpack.c.l.bf16 %v1544
        %v1561 = vunpack.c.l.bf16 %v1545
        %v1562 = vunpack.c.l.bf16 %v1546
        %v1563 = vunpack.c.l.bf16 %v1547
        %v1564 = vunpack.c.l.bf16 %v1548
        %v1565 = vunpack.c.l.bf16 %v1549
        %s1566 = scalar_lea.vmem %s383, 2
        %v1567 = vld [vmem:[%s1566] sm:$0x1]
        %v1569 = vlaneseq
        %v1570 = vshrl.u32 %v1569, 7
        %v1571 = vsub.s32 0, %v1570
        %v1572 = vrot.slane %v1567, %v1571
        %1574 = vmatprep.subr.mxu0 0.0
        %1575 = vmatpush1.msra.mxu0 %v1550
        %1576 = vmatprep.subr.mxu0 0.0
        %1577 = vmatpush1.msra.mxu0 %v1551
        %1578 = vmatprep.subr.mxu0 0.0
        %1579 = vmatpush1.msra.mxu0 %v1552
        %1580 = vmatprep.subr.mxu0 0.0
        %1581 = vmatpush1.msra.mxu0 %v1553
        %1582 = vmatprep.subr.mxu0 0.0
        %1583 = vmatpush1.msra.mxu0 %v1554
        %1584 = vmatprep.subr.mxu0 0.0
        %1585 = vmatpush1.msra.mxu0 %v1555
        %1586 = vmatprep.subr.mxu0 0.0
        %1587 = vmatpush1.msra.mxu0 %v1556
        %1588 = vmatprep.subr.mxu0 0.0
        %1589 = vmatpush1.msra.mxu0 %v1557
        %1590 = vmatprep.subr.mxu0 0.0
        %1591 = vmatpush1.msra.mxu0 %v1558
        %1592 = vmatprep.subr.mxu0 0.0
        %1593 = vmatpush1.msra.mxu0 %v1559
        %1594 = vmatprep.subr.mxu0 0.0
        %1595 = vmatpush1.msra.mxu0 %v1560
        %1596 = vmatprep.subr.mxu0 0.0
        %1597 = vmatpush1.msra.mxu0 %v1561
        %1598 = vmatprep.subr.mxu0 0.0
        %1599 = vmatpush1.msra.mxu0 %v1562
        %1600 = vmatprep.subr.mxu0 0.0
        %1601 = vmatpush1.msra.mxu0 %v1563
        %1602 = vmatprep.subr.mxu0 0.0
        %1603 = vmatpush1.msra.mxu0 %v1564
        %1604 = vmatprep.subr.mxu0 0.0
        %1605 = vmatpush1.msra.mxu0 %v1565
        %1606 = vmatprep.subr.mxu0 0.0
        %1607 = vmatpush1.msra.mxu0 0.0
        %1608 = vmatprep.subr.mxu0 0.0
        %1609 = vmatpush1.msra.mxu0 0.0
        %1610 = vmatprep.subr.mxu0 0.0
        %1611 = vmatpush1.msra.mxu0 0.0
        %1612 = vmatprep.subr.mxu0 0.0
        %1613 = vmatpush1.msra.mxu0 0.0
        %1614 = vmatprep.subr.mxu0 0.0
        %1615 = vmatpush1.msra.mxu0 0.0
        %1616 = vmatprep.subr.mxu0 0.0
        %1617 = vmatpush1.msra.mxu0 0.0
        %1618 = vmatprep.subr.mxu0 0.0
        %1619 = vmatpush1.msra.mxu0 0.0
        %1620 = vmatprep.subr.mxu0 0.0
        %1621 = vmatpush1.msra.mxu0 0.0
        %1622 = vmatprep.subr.mxu0 0.0
        %1623 = vmatpush1.msra.mxu0 0.0
        %1624 = vmatprep.subr.mxu0 0.0
        %1625 = vmatpush1.msra.mxu0 0.0
        %1626 = vmatprep.subr.mxu0 0.0
        %1627 = vmatpush1.msra.mxu0 0.0
        %1628 = vmatprep.subr.mxu0 0.0
        %1629 = vmatpush1.msra.mxu0 0.0
        %1630 = vmatprep.subr.mxu0 0.0
        %1631 = vmatpush1.msra.mxu0 0.0
        %1632 = vmatprep.subr.mxu0 0.0
        %1633 = vmatpush1.msra.mxu0 0.0
        %1634 = vmatprep.subr.mxu0 0.0
        %1635 = vmatpush1.msra.mxu0 0.0
        %1636 = vmatprep.subr.mxu0 0.0
        %1637 = vmatpush1.msra.mxu0 0.0
        %1638 = vmatprep.mubr.f32.mxu0 0.0
        %1639 = vmatmul.mubr.f32.gmra.mrb[0].mxu0 %v1532
        %v1640 = vpop.f32.mrb[0].mxu0
        %v1641 = vadd.f32 %v1572, %v1640
        %v1642 = vpop.f32.mrb[0].mxu0
        %1643 = vdwg.mxu0
        %1645 = vrot.lane.b32.xlu0 %v1222, 8
        %v1646 = vpop.permute.xlu0 %1645
        %1649 = vrot.lane.b32.xlu0 %v1641, 16
        %v1650 = vpop.permute.xlu0 %1649
        %vm1652 = vcmask 64512
        %v1653 = vsel %vm1652, %v803, %v1646
        %v1654 = vsel %vm400, %v1653, %v1650
        %vm1655 = vcmask 195584
        %v1656 = vsel %vm1655, %v1654, 0.0
        %1657 = vst [vmem:[%s387] sm:$0xff] %v1656
        %p1658 = scmp.lt.s32.totalorder %s21, 1
        %s1659 = scalar_select %p1658, %s21, 1
        %s1660 = smul.addr %s1659, 8
        %s1661 = scalar_lea.vmem %s7, %s1660
        // Predicated region
        $region53: #{multi_dqn_forward.1} parent=47 // pred_check
          %p1662 = pneg %p216
        $region54: #{multi_dqn_forward.1} parent=47 // pred_check_branch
          %1664 = sbr.rel (%p1662) target = $region56
        $region55: #{multi_dqn_forward.1} parent=47 // pred_region
          _
        $region56: #{multi_dqn_forward.1} parent=47 // pred_fallthru
          _
      $region48: #{multi_dqn_forward.1} parent=5 // pred_fallthru
        _
      %p1665 = scmp.le.s32.totalorder 2, %s16
      // Predicated region
      $region57: #{multi_dqn_forward.1} parent=5 // pred_check
        %p1666 = pneg %p1665
      $region58: #{multi_dqn_forward.1} parent=5 // pred_check_branch
        %1668 = sbr.rel (%p1666) target = $region60
      $region59: #{multi_dqn_forward.1} parent=5 // pred_region
        %s1669 = ssub.s32 %s16, 2
        // Predicated region
        $region61: #{multi_dqn_forward.1} parent=59 // pred_check
          %p1670 = pneg %p222
        $region62: #{multi_dqn_forward.1} parent=59 // pred_check_branch
          %1672 = sbr.rel (%p1670) target = $region64
        $region63: #{multi_dqn_forward.1} parent=59 // pred_region
          %p1673 = scmp.lt.s32.totalorder %s22, 1
          %s1674 = scalar_select %p1673, %s22, 1
          %s1675 = smul.addr %s1674, 8
          %s1676 = scalar_lea.vmem %s7, %s1675
        $region64: #{multi_dqn_forward.1} parent=59 // pred_fallthru
          _
      $region60: #{multi_dqn_forward.1} parent=5 // pred_fallthru
        _
    $region6: #{multi_dqn_forward.1} parent=1 // loop_footer
      %s20 = sadd.s32 1, %s16
    $region7: #{multi_dqn_forward.1} parent=1 // loop_footer_branch
      %15 = sbr.rel target = $region3
    $region8: #{multi_dqn_forward.1} parent=1 // loop_exit
      _
    %1677 = vsyncpa [#allocation3], 1
    %s1678 = scalar_lea.sflag [#allocation3], 1
    %1679 = vsyncpa %s1678, 1

</llo_original>
